<compile_context>
chip_gen: v7x
topology: tpu7x:2x2x1
jax: 0.10.0
libtpu: 0.0.40
codegen_flags: <defaults>
</compile_context>

<pallas_src>
import functools

import jax
import jax.numpy as jnp
from jax.experimental import pallas as pl
from jax.experimental.pallas import tpu as pltpu


def _pick_tile(n, target):
    """Largest tile <= target that divides n and is a multiple of 8, else n."""
    if n <= target:
        return n
    for t in (512, 256, 128, 64, 32, 16, 8):
        if t <= target and n % t == 0:
            return t
    return n  # fall back to the full dimension (always a legal block)


# ---------------------------------------------------------------------------
# Kernel 1: fused Q/K/V projection, output in (B, H, L, dh) head-major layout.
# ---------------------------------------------------------------------------
def _qkv_proj_kernel(x_ref, wq_ref, bq_ref, wk_ref, bk_ref, wv_ref, bv_ref,
                     q_ref, k_ref, v_ref, *, heads, dhead):
    x = x_ref[0]  # (tl, D) bf16

    def proj(w_ref, b_ref, o_ref):
        # bf16 MXU inputs, f32 accumulation; bias added in f32.
        y = jnp.dot(x, w_ref[...], preferred_element_type=jnp.float32)
        y = y + b_ref[...]                           # (tl, H*dh) f32
        tl = y.shape[0]
        y = y.reshape(tl, heads, dhead)              # split heads
        y = jnp.transpose(y, (1, 0, 2))              # (H, tl, dh)
        o_ref[0] = y.astype(o_ref.dtype)

    proj(wq_ref, bq_ref, q_ref)
    proj(wk_ref, bk_ref, k_ref)
    proj(wv_ref, bv_ref, v_ref)


# ---------------------------------------------------------------------------
# Kernel 2: flash attention (online softmax over key tiles) + fused output
# projection D at the last key step.
# ---------------------------------------------------------------------------
def _flash_attn_kernel(q_ref, k_ref, v_ref, wd_ref, bd_ref, o_ref,
                       m_ref, l_ref, acc_ref, *, scale):
    ki = pl.program_id(2)

    @pl.when(ki == 0)
    def _():
        m_ref[...] = jnp.full(m_ref.shape, -jnp.inf, dtype=jnp.float32)
        l_ref[...] = jnp.zeros(l_ref.shape, dtype=jnp.float32)
        acc_ref[...] = jnp.zeros(acc_ref.shape, dtype=jnp.float32)

    q = q_ref[0]  # (H, tq, dh) bf16
    k = k_ref[0]  # (H, tk, dh) bf16
    v = v_ref[0]  # (H, tk, dh) bf16

    # Scores for all heads in one batched dot_general (no explicit transpose).
    s = jnp.einsum('hqd,hkd->hqk', q, k,
                   preferred_element_type=jnp.float32) * scale   # (H,tq,tk) f32

    # Online softmax update (all f32 on the VPU/EUP).
    m_prev = m_ref[...]
    m_new = jnp.maximum(m_prev, jnp.max(s, axis=-1, keepdims=True))
    alpha = jnp.exp(m_prev - m_new)
    p = jnp.exp(s - m_new)
    l_ref[...] = alpha * l_ref[...] + jnp.sum(p, axis=-1, keepdims=True)
    acc_ref[...] = alpha * acc_ref[...] + jnp.einsum(
        'hqk,hkd->hqd', p.astype(v.dtype), v,
        preferred_element_type=jnp.float32)
    m_ref[...] = m_new

    @pl.when(ki == pl.num_programs(2) - 1)
    def _():
        # Normalize with approximate reciprocal (EUP slot, VALU stays free).
        norm = acc_ref[...] * pl.reciprocal(l_ref[...], approx=True)  # (H,tq,dh)
        h, tq, dh = norm.shape
        pf = jnp.transpose(norm, (1, 0, 2)).reshape(tq, h * dh)       # (tq, H*dh)
        out = jnp.dot(pf.astype(wd_ref.dtype), wd_ref[...],
                      preferred_element_type=jnp.float32) + bd_ref[...]
        o_ref[0] = out.astype(o_ref.dtype)


# ---------------------------------------------------------------------------
# Wrapper
# ---------------------------------------------------------------------------
def attention_pallas(x, params, *, heads, dhead,
                     proj_tile=256, q_tile=256, k_tile=256):
    B, L, D = x.shape
    HD = heads * dhead
    assert HD == D, "default EinMix path requires heads * dhead == dmodel"

    wq, bq, wk, bk, wv, bv, wd, bd = params
    cdt = jnp.bfloat16  # MXU compute dtype (accumulation stays f32)

    tl = _pick_tile(L, proj_tile)
    tq = _pick_tile(L, q_tile)
    tk = _pick_tile(L, k_tile)
    n_l, n_q, n_k = L // tl, L // tq, L // tk

    x_c = x.astype(cdt)
    w_q, w_k, w_v, w_d = (w.astype(cdt) for w in (wq, wk, wv, wd))
    b_q = bq.reshape(1, HD).astype(jnp.float32)
    b_k = bk.reshape(1, HD).astype(jnp.float32)
    b_v = bv.reshape(1, HD).astype(jnp.float32)
    b_d = bd.reshape(1, HD).astype(jnp.float32)

    # ---------------- Kernel 1: QKV projections ----------------
    w_spec = pl.BlockSpec((D, HD), lambda b, i: (0, 0))
    bias_spec = pl.BlockSpec((1, HD), lambda b, i: (0, 0))
    qkv_out_spec = pl.BlockSpec((1, heads, tl, dhead), lambda b, i: (b, 0, i, 0))
    qkv_shape = jax.ShapeDtypeStruct((B, heads, L, dhead), cdt)

    proj_cost = pl.CostEstimate(
        flops=int(2 * B * L * D * 3 * HD),
        transcendentals=0,
        bytes_accessed=int((B * L * D + 3 * D * HD + 3 * B * L * HD) * 2),
    )

    q, k, v = pl.pallas_call(
        functools.partial(_qkv_proj_kernel, heads=heads, dhead=dhead),
        out_shape=(qkv_shape, qkv_shape, qkv_shape),
        grid_spec=pltpu.PrefetchScalarGridSpec(
            num_scalar_prefetch=0,
            grid=(B, n_l),
            in_specs=[
                pl.BlockSpec((1, tl, D), lambda b, i: (b, i, 0)),   # x
                w_spec, bias_spec,                                  # Q
                w_spec, bias_spec,                                  # K
                w_spec, bias_spec,                                  # V
            ],
            out_specs=(qkv_out_spec, qkv_out_spec, qkv_out_spec)),
        compiler_params=pltpu.CompilerParams(
            dimension_semantics=("parallel", "parallel")),
        cost_estimate=proj_cost,
    )(x_c, w_q, b_q, w_k, b_k, w_v, b_v)

    # ---------------- Kernel 2: flash attention + D projection ----------------
    attn_cost = pl.CostEstimate(
        flops=int(4 * B * heads * L * L * dhead + 2 * B * L * HD * D),
        transcendentals=int(B * heads * L * L),
        bytes_accessed=int(3 * B * heads * L * dhead * 2 + D * HD * 2
                           + B * L * HD * x.dtype.itemsize),
    )

    out = pl.pallas_call(
        functools.partial(_flash_attn_kernel, scale=1.0 / (dhead ** 0.5)),
        out_shape=jax.ShapeDtypeStruct((B, L, HD), x.dtype),
        grid_spec=pltpu.PrefetchScalarGridSpec(
            num_scalar_prefetch=0,
            grid=(B, n_q, n_k),
            in_specs=[
                pl.BlockSpec((1, heads, tq, dhead), lambda b, qi, ki: (b, 0, qi, 0)),  # q
                pl.BlockSpec((1, heads, tk, dhead), lambda b, qi, ki: (b, 0, ki, 0)),  # k
                pl.BlockSpec((1, heads, tk, dhead), lambda b, qi, ki: (b, 0, ki, 0)),  # v
                pl.BlockSpec((D, HD), lambda b, qi, ki: (0, 0)),                       # wd
                pl.BlockSpec((1, HD), lambda b, qi, ki: (0, 0)),                       # bd
            ],
            out_specs=pl.BlockSpec((1, tq, HD), lambda b, qi, ki: (b, qi, 0)),
            scratch_shapes=[
                pltpu.VMEM((heads, tq, 1), jnp.float32),      # running max
                pltpu.VMEM((heads, tq, 1), jnp.float32),      # running sum
                pltpu.VMEM((heads, tq, dhead), jnp.float32),  # accumulator
            ]),
        compiler_params=pltpu.CompilerParams(
            dimension_semantics=("parallel", "parallel", "arbitrary")),
        cost_estimate=attn_cost,
    )(q, k, v, w_d, b_d)

    return out


def attention_reference(x, params, *, heads, dhead):
    """Pure-JAX (f32) reference mirroring the PyTorch forward exactly."""
    wq, bq, wk, bk, wv, bv, wd, bd = params
    B, L, D = x.shape

    def proj(w, b):
        y = jnp.einsum('bld,de->ble', x, w) + b
        return y.reshape(B, L, heads, dhead)

    q = proj(wq, bq)
    k = proj(wk, bk)
    v = proj(wv, bv)

    a = jnp.einsum('blhd,bLhd->bhlL', q, k) * (1.0 / dhead ** 0.5)
    a = jax.nn.softmax(a, axis=-1)
    prefinal = jnp.einsum('bhlL,bLhd->blhd', a, v)
    pf = prefinal.reshape(B, L, heads * dhead)
    return jnp.einsum('bld,de->ble', pf, wd) + bd


if __name__ == "__main__":
    B, L = 2, 32
    dmodel, heads = 32, 4
    dhead = dmodel // heads
    hd = heads * dhead

    key = jax.random.PRNGKey(0)
    keys = jax.random.split(key, 9)
    x = jax.random.normal(keys[0], (B, L, dmodel), dtype=jnp.float32)

    def init_w(k):
        return jax.random.normal(k, (dmodel, hd), dtype=jnp.float32) * 0.1

    def init_b(k):
        return jax.random.normal(k, (hd,), dtype=jnp.float32) * 0.01

    params = (
        init_w(keys[1]), init_b(keys[2]),   # Q
        init_w(keys[3]), init_b(keys[4]),   # K
        init_w(keys[5]), init_b(keys[6]),   # V
        init_w(keys[7]), init_b(keys[8]),   # D
    )

    # Small tiles so the test exercises multiple query/key grid steps
    # (online-softmax accumulation across key tiles).
    out = attention_pallas(x, params, heads=heads, dhead=dhead,
                           proj_tile=16, q_tile=16, k_tile=16)
    out = jax.block_until_ready(out)

    ref = attention_reference(x, params, heads=heads, dhead=dhead)
    assert out.shape == (B, L, dmodel)
    max_err = jnp.max(jnp.abs(out - ref))
    # bf16 MXU inputs (f32 accumulation / f32 softmax) -> loosened tolerance.
    assert jnp.allclose(out, ref, atol=2e-2, rtol=2e-2), \
        f"mismatch vs reference, max abs err={max_err}"

    print("KERNEL_OK")
</pallas_src>

<mosaic_0001>
module attributes {stable_mosaic.version = 11 : i64} {
  func.func @_qkv_proj_kernel(%arg0: i32, %arg1: i32, %arg2: memref<1x16x32xbf16, #tpu.memory_space<vmem>>, %arg3: memref<32x32xbf16, #tpu.memory_space<vmem>>, %arg4: memref<1x32xf32, #tpu.memory_space<vmem>>, %arg5: memref<32x32xbf16, #tpu.memory_space<vmem>>, %arg6: memref<1x32xf32, #tpu.memory_space<vmem>>, %arg7: memref<32x32xbf16, #tpu.memory_space<vmem>>, %arg8: memref<1x32xf32, #tpu.memory_space<vmem>>, %arg9: memref<1x4x16x8xbf16, #tpu.memory_space<vmem>>, %arg10: memref<1x4x16x8xbf16, #tpu.memory_space<vmem>>, %arg11: memref<1x4x16x8xbf16, #tpu.memory_space<vmem>>) attributes {dimension_semantics = [#tpu.dimension_semantics<parallel>, #tpu.dimension_semantics<parallel>], iteration_bounds = array<i64: 2, 2>, scalar_prefetch = 0 : i64, scratch_operands = 0 : i64, tpu.core_type = #tpu.core_type<tc>, window_params = [{transform_indices = @transform_0, window_bounds = array<i64: 1, 16, 32>}, {pipeline_mode = #tpu.pipeline_mode<synchronous>, transform_indices = @transform_1, window_bounds = array<i64: 32, 32>}, {pipeline_mode = #tpu.pipeline_mode<synchronous>, transform_indices = @transform_2, window_bounds = array<i64: 1, 32>}, {pipeline_mode = #tpu.pipeline_mode<synchronous>, transform_indices = @transform_3, window_bounds = array<i64: 32, 32>}, {pipeline_mode = #tpu.pipeline_mode<synchronous>, transform_indices = @transform_4, window_bounds = array<i64: 1, 32>}, {pipeline_mode = #tpu.pipeline_mode<synchronous>, transform_indices = @transform_5, window_bounds = array<i64: 32, 32>}, {pipeline_mode = #tpu.pipeline_mode<synchronous>, transform_indices = @transform_6, window_bounds = array<i64: 1, 32>}, {transform_indices = @transform_7, window_bounds = array<i64: 1, 4, 16, 8>}, {transform_indices = @transform_8, window_bounds = array<i64: 1, 4, 16, 8>}, {transform_indices = @transform_9, window_bounds = array<i64: 1, 4, 16, 8>}]} {
    %c0 = arith.constant 0 : index
    %c0_0 = arith.constant 0 : index
    %c0_1 = arith.constant 0 : index
    %0 = vector.load %arg2[%c0, %c0_0, %c0_1] : memref<1x16x32xbf16, #tpu.memory_space<vmem>>, vector<1x16x32xbf16>
    %1 = vector.shape_cast %0 : vector<1x16x32xbf16> to vector<16x32xbf16>
    %c0_2 = arith.constant 0 : index
    %c0_3 = arith.constant 0 : index
    %2 = vector.load %arg3[%c0_2, %c0_3] : memref<32x32xbf16, #tpu.memory_space<vmem>>, vector<32x32xbf16>
    %cst = arith.constant dense<0.000000e+00> : vector<16x32xf32>
    %3 = tpu.matmul %1, %2, %cst {dimension_numbers = #tpu.dot_dimension_numbers<[1], [0], [0], [1], [0, 0, 1, 1], [], []>} : vector<16x32xbf16>, vector<32x32xbf16>, vector<16x32xf32> -> vector<16x32xf32>
    %c0_4 = arith.constant 0 : index
    %c0_5 = arith.constant 0 : index
    %4 = vector.load %arg4[%c0_4, %c0_5] : memref<1x32xf32, #tpu.memory_space<vmem>>, vector<1x32xf32>
    %5 = vector.broadcast %4 : vector<1x32xf32> to vector<16x32xf32>
    %6 = arith.addf %3, %5 : vector<16x32xf32>
    %7 = vector.shape_cast %6 : vector<16x32xf32> to vector<16x4x8xf32>
    %8 = tpu.transpose %7, [1, 0, 2] : vector<16x4x8xf32> -> vector<4x16x8xf32>
    %9 = arith.truncf %8 : vector<4x16x8xf32> to vector<4x16x8xbf16>
    %c0_6 = arith.constant 0 : index
    %c0_7 = arith.constant 0 : index
    %c0_8 = arith.constant 0 : index
    %c0_9 = arith.constant 0 : index
    %10 = vector.load %arg9[%c0_6, %c0_7, %c0_8, %c0_9] : memref<1x4x16x8xbf16, #tpu.memory_space<vmem>>, vector<1x4x16x8xbf16>
    %11 = vector.shape_cast %10 : vector<1x4x16x8xbf16> to vector<4x16x8xbf16>
    %12 = vector.shape_cast %9 : vector<4x16x8xbf16> to vector<1x4x16x8xbf16>
    tpu.vector_store %arg9[%c0_6, %c0_7, %c0_8, %c0_9], %12 {strides = array<i32>} : memref<1x4x16x8xbf16, #tpu.memory_space<vmem>>, vector<1x4x16x8xbf16>,
    %c0_10 = arith.constant 0 : index
    %c0_11 = arith.constant 0 : index
    %13 = vector.load %arg5[%c0_10, %c0_11] : memref<32x32xbf16, #tpu.memory_space<vmem>>, vector<32x32xbf16>
    %cst_12 = arith.constant dense<0.000000e+00> : vector<16x32xf32>
    %14 = tpu.matmul %1, %13, %cst_12 {dimension_numbers = #tpu.dot_dimension_numbers<[1], [0], [0], [1], [0, 0, 1, 1], [], []>} : vector<16x32xbf16>, vector<32x32xbf16>, vector<16x32xf32> -> vector<16x32xf32>
    %c0_13 = arith.constant 0 : index
    %c0_14 = arith.constant 0 : index
    %15 = vector.load %arg6[%c0_13, %c0_14] : memref<1x32xf32, #tpu.memory_space<vmem>>, vector<1x32xf32>
    %16 = vector.broadcast %15 : vector<1x32xf32> to vector<16x32xf32>
    %17 = arith.addf %14, %16 : vector<16x32xf32>
    %18 = vector.shape_cast %17 : vector<16x32xf32> to vector<16x4x8xf32>
    %19 = tpu.transpose %18, [1, 0, 2] : vector<16x4x8xf32> -> vector<4x16x8xf32>
    %20 = arith.truncf %19 : vector<4x16x8xf32> to vector<4x16x8xbf16>
    %c0_15 = arith.constant 0 : index
    %c0_16 = arith.constant 0 : index
    %c0_17 = arith.constant 0 : index
    %c0_18 = arith.constant 0 : index
    %21 = vector.load %arg10[%c0_15, %c0_16, %c0_17, %c0_18] : memref<1x4x16x8xbf16, #tpu.memory_space<vmem>>, vector<1x4x16x8xbf16>
    %22 = vector.shape_cast %21 : vector<1x4x16x8xbf16> to vector<4x16x8xbf16>
    %23 = vector.shape_cast %20 : vector<4x16x8xbf16> to vector<1x4x16x8xbf16>
    tpu.vector_store %arg10[%c0_15, %c0_16, %c0_17, %c0_18], %23 {strides = array<i32>} : memref<1x4x16x8xbf16, #tpu.memory_space<vmem>>, vector<1x4x16x8xbf16>,
    %c0_19 = arith.constant 0 : index
    %c0_20 = arith.constant 0 : index
    %24 = vector.load %arg7[%c0_19, %c0_20] : memref<32x32xbf16, #tpu.memory_space<vmem>>, vector<32x32xbf16>
    %cst_21 = arith.constant dense<0.000000e+00> : vector<16x32xf32>
    %25 = tpu.matmul %1, %24, %cst_21 {dimension_numbers = #tpu.dot_dimension_numbers<[1], [0], [0], [1], [0, 0, 1, 1], [], []>} : vector<16x32xbf16>, vector<32x32xbf16>, vector<16x32xf32> -> vector<16x32xf32>
    %c0_22 = arith.constant 0 : index
    %c0_23 = arith.constant 0 : index
    %26 = vector.load %arg8[%c0_22, %c0_23] : memref<1x32xf32, #tpu.memory_space<vmem>>, vector<1x32xf32>
    %27 = vector.broadcast %26 : vector<1x32xf32> to vector<16x32xf32>
    %28 = arith.addf %25, %27 : vector<16x32xf32>
    %29 = vector.shape_cast %28 : vector<16x32xf32> to vector<16x4x8xf32>
    %30 = tpu.transpose %29, [1, 0, 2] : vector<16x4x8xf32> -> vector<4x16x8xf32>
    %31 = arith.truncf %30 : vector<4x16x8xf32> to vector<4x16x8xbf16>
    %c0_24 = arith.constant 0 : index
    %c0_25 = arith.constant 0 : index
    %c0_26 = arith.constant 0 : index
    %c0_27 = arith.constant 0 : index
    %32 = vector.load %arg11[%c0_24, %c0_25, %c0_26, %c0_27] : memref<1x4x16x8xbf16, #tpu.memory_space<vmem>>, vector<1x4x16x8xbf16>
    %33 = vector.shape_cast %32 : vector<1x4x16x8xbf16> to vector<4x16x8xbf16>
    %34 = vector.shape_cast %31 : vector<4x16x8xbf16> to vector<1x4x16x8xbf16>
    tpu.vector_store %arg11[%c0_24, %c0_25, %c0_26, %c0_27], %34 {strides = array<i32>} : memref<1x4x16x8xbf16, #tpu.memory_space<vmem>>, vector<1x4x16x8xbf16>,
    return
  }
  func.func @transform_0(%arg0: i32, %arg1: i32) -> (i32, i32, i32) {
    %c0_i32 = arith.constant 0 : i32
    %c0_i32_0 = arith.constant 0 : i32
    return %arg0, %arg1, %c0_i32 : i32, i32, i32
  }
  func.func @transform_1(%arg0: i32, %arg1: i32) -> (i32, i32) {
    %c0_i32 = arith.constant 0 : i32
    %c0_i32_0 = arith.constant 0 : i32
    %c0_i32_1 = arith.constant 0 : i32
    return %c0_i32, %c0_i32_0 : i32, i32
  }
  func.func @transform_2(%arg0: i32, %arg1: i32) -> (i32, i32) {
    %c0_i32 = arith.constant 0 : i32
    %c0_i32_0 = arith.constant 0 : i32
    %c0_i32_1 = arith.constant 0 : i32
    return %c0_i32, %c0_i32_0 : i32, i32
  }
  func.func @transform_3(%arg0: i32, %arg1: i32) -> (i32, i32) {
    %c0_i32 = arith.constant 0 : i32
    %c0_i32_0 = arith.constant 0 : i32
    %c0_i32_1 = arith.constant 0 : i32
    return %c0_i32, %c0_i32_0 : i32, i32
  }
  func.func @transform_4(%arg0: i32, %arg1: i32) -> (i32, i32) {
    %c0_i32 = arith.constant 0 : i32
    %c0_i32_0 = arith.constant 0 : i32
    %c0_i32_1 = arith.constant 0 : i32
    return %c0_i32, %c0_i32_0 : i32, i32
  }
  func.func @transform_5(%arg0: i32, %arg1: i32) -> (i32, i32) {
    %c0_i32 = arith.constant 0 : i32
    %c0_i32_0 = arith.constant 0 : i32
    %c0_i32_1 = arith.constant 0 : i32
    return %c0_i32, %c0_i32_0 : i32, i32
  }
  func.func @transform_6(%arg0: i32, %arg1: i32) -> (i32, i32) {
    %c0_i32 = arith.constant 0 : i32
    %c0_i32_0 = arith.constant 0 : i32
    %c0_i32_1 = arith.constant 0 : i32
    return %c0_i32, %c0_i32_0 : i32, i32
  }
  func.func @transform_7(%arg0: i32, %arg1: i32) -> (i32, i32, i32, i32) {
    %c0_i32 = arith.constant 0 : i32
    %c0_i32_0 = arith.constant 0 : i32
    %c0_i32_1 = arith.constant 0 : i32
    return %arg0, %c0_i32, %arg1, %c0_i32_0 : i32, i32, i32, i32
  }
  func.func @transform_8(%arg0: i32, %arg1: i32) -> (i32, i32, i32, i32) {
    %c0_i32 = arith.constant 0 : i32
    %c0_i32_0 = arith.constant 0 : i32
    %c0_i32_1 = arith.constant 0 : i32
    return %arg0, %c0_i32, %arg1, %c0_i32_0 : i32, i32, i32, i32
  }
  func.func @transform_9(%arg0: i32, %arg1: i32) -> (i32, i32, i32, i32) {
    %c0_i32 = arith.constant 0 : i32
    %c0_i32_0 = arith.constant 0 : i32
    %c0_i32_1 = arith.constant 0 : i32
    return %arg0, %c0_i32, %arg1, %c0_i32_0 : i32, i32, i32, i32
  }
}

</mosaic_0001>

<llo_original>
// kernel: tpu_custom_call.1
$region0: #{tpu_custom_call.1}
  #allocation0 [shape = 'u32[]', space=smem, size = 0x4, offset = 0x4, fixed_abs, tag = 'smem constant byte address 0x4 - core index']
  #allocation1 [shape = 'u32[144,128]{1,0:T(1,128)}', space=vmem, size = 0x12000, scoped, tag = 'internal scratch']
  %s0 = inlined_call_operand.hbm [shape: bf16[2,32,32], index: 0, kind: input, shape index: {}]
  %s1 = inlined_call_operand.hbm [shape: bf16[32,32], index: 1, kind: input, shape index: {}]
  %s2 = inlined_call_operand.vmem [shape: f32[1,32], index: 2, kind: input, shape index: {}]
  %s3 = inlined_call_operand.hbm [shape: bf16[32,32], index: 3, kind: input, shape index: {}]
  %s4 = inlined_call_operand.vmem [shape: f32[1,32], index: 4, kind: input, shape index: {}]
  %s5 = inlined_call_operand.vmem [shape: bf16[32,32], index: 5, kind: input, shape index: {}]
  %s6 = inlined_call_operand.vmem [shape: f32[1,32], index: 6, kind: input, shape index: {}]
  %s7 = inlined_call_operand.vmem [shape: bf16[2,4,32,8], index: 7, kind: output, shape index: {0}]
  %s8 = inlined_call_operand.vmem [shape: bf16[2,4,32,8], index: 8, kind: output, shape index: {1}]
  %s9 = inlined_call_operand.vmem [shape: bf16[2,4,32,8], index: 9, kind: output, shape index: {2}]
  %10 = xla_tuple %s7, %s8, %s9
  %s11 = sld [smem:[#allocation0]]
  $region200: #{tpu_custom_call.1} parent=0
    _
  %s13 = ssub.s32 1, %s11
  %s14 = scalar_select 0, %s13, %s11
  $region1: #{tpu_custom_call.1} parent=0
    #allocation2 [shape = 'u8[8192]{0}', space=vmem, size = 0x2000, scoped, tag = 'input window, operand 0']
    #allocation3 [shape = 's32[2]{0}', space=sflag, size = 0x8, scoped, tag = 'scoped memory for tpu_custom_call.1']
    #allocation4 [shape = 'u8[8192]{0}', space=vmem, size = 0x2000, scoped, tag = 'input window, operand 1, single buffered']
    #allocation5 [shape = 's32[1]{0}', space=sflag, size = 0x4, scoped, tag = 'scoped memory for tpu_custom_call.1']
    #allocation6 [shape = 'u8[8192]{0}', space=vmem, size = 0x2000, scoped, tag = 'input window, operand 3, single buffered']
    #allocation7 [shape = 'u8[32768]{0}', space=vmem, size = 0x8000, scoped, tag = 'output window, operand 0']
    #allocation8 [shape = 'u8[32768]{0}', space=vmem, size = 0x8000, scoped, tag = 'output window, operand 1']
    #allocation9 [shape = 'u8[32768]{0}', space=vmem, size = 0x8000, scoped, tag = 'output window, operand 2']
    %15 = vsyncpa [#allocation3], 0
    %s16 = scalar_lea.sflag [#allocation3], 1
    %17 = vsyncpa %s16, 0
    %18 = vsyncpa [#allocation5], 0
    loop: start=0, step=1, limit=6
    $region2: #{tpu_custom_call.1} parent=1 // loop_pre_header
      _
    $region3: #{tpu_custom_call.1} parent=1 // loop_header
      %s20 = sphi 0, %s24
      %p21 = scmp.ge.s32.totalorder %s20, 6
      %s27 = sphi 0, %s39
      %s28 = sphi 0, %s35
      %s29 = sphi 0, %s27
      %s30 = sphi 0, %s28
      %s31 = sphi 0, %s29
      %s32 = sphi 0, %s30
      %s44 = sphi 0, %s46
      %s47 = sphi 0, %s44
      %s48 = sphi 0, %s47
      %s64 = sphi 0, %s48
      %s68 = sphi 0, %s68
      %s70 = sphi 0, %s68
      %s71 = sphi 0, %s70
      %s85 = sphi 0, %s71
      %s89 = sphi 0, %s89
      %s91 = sphi 0, %s89
      %s92 = sphi 0, %s91
      %s106 = sphi 0, %s92
      %s110 = sphi 0, %s110
      %s112 = sphi 0, %s110
      %s113 = sphi 0, %s112
      %s127 = sphi 0, %s113
      %s131 = sphi 0, %s131
      %s133 = sphi 0, %s131
      %s134 = sphi 0, %s133
      %s148 = sphi 0, %s134
      %s152 = sphi 0, %s152
      %s154 = sphi 0, %s152
      %s155 = sphi 0, %s154
      %s169 = sphi 0, %s155
      %s173 = sphi 0, %s173
      %s175 = sphi 0, %s173
      %s176 = sphi 0, %s175
      %s190 = sphi 0, %s176
      %s198 = sphi 0, %s200
      %s201 = sphi 0, %s198
      %s202 = sphi 0, %s201
      %s218 = sphi 0, %s202
      %s226 = sphi 0, %s228
      %s229 = sphi 0, %s226
      %s230 = sphi 0, %s229
      %s246 = sphi 0, %s230
      %s254 = sphi 0, %s256
      %s257 = sphi 0, %s254
      %s258 = sphi 0, %s257
      %s274 = sphi 0, %s258
    $region4: #{tpu_custom_call.1} parent=1 // loop_header_branch
      %23 = sbr.rel (%p21) target = $region8
    $region5: #{tpu_custom_call.1} parent=1 // loop_body
      %s25 = ssub.s32 %s20, 1
      %s26 = ssub.s32 %s20, 2
      %s33 = sadd.s32 1, %s28
      %p34 = scmp.ge.s32.totalorder %s33, 2
      %s35 = scalar_select %p34, 0, %s33
      %s36 = sadd.s32 1, %s27
      %s37 = scalar_select %p34, %s36, %s27
      %p38 = scmp.ge.s32.totalorder %s37, 2
      %s39 = scalar_select %p38, 0, %s37
      %s40 = ssub.s32 %s27, %s39
      %s41 = ssub.s32 %s28, %s35
      %s42 = sor.u32 %s40, %s41
      %p43 = scmp.eq.s32.totalorder %s42, 0
      %s45 = sadd.s32 %s44, 1
      %s46 = scalar_select %p43, %s44, %s45
      %p49 = pneg %p43
      %p50 = scmp.eq.s32.totalorder %s20, 3
      %p51 = por %p49, %p50
      %p52 = scmp.ne.s32.totalorder %s44, %s47
      %p53 = scmp.eq.s32.totalorder %s20, 0
      %p54 = por %p52, %p53
      %p55 = scmp.ne.s32.totalorder %s44, %s47
      %p56 = scmp.eq.s32.totalorder %s25, 3
      %p57 = por %p55, %p56
      %p58 = scmp.ne.s32.totalorder %s47, %s48
      %p59 = scmp.eq.s32.totalorder %s25, 0
      %p60 = por %p58, %p59
      %p61 = scmp.ne.s32.totalorder %s47, %s48
      %p62 = scmp.eq.s32.totalorder %s26, 3
      %p63 = por %p61, %p62
      %p65 = scmp.ne.s32.totalorder %s48, %s64
      %p66 = scmp.eq.s32.totalorder %s26, 0
      %p67 = por %p65, %p66
      %s69 = sadd.s32 %s68, 1
      %p72 = scmp.eq.s32.totalorder %s20, 3
      %p73 = scmp.ne.s32.totalorder %s68, %s70
      %p74 = scmp.eq.s32.totalorder %s20, 0
      %p75 = por %p73, %p74
      %p76 = scmp.ne.s32.totalorder %s68, %s70
      %p77 = scmp.eq.s32.totalorder %s25, 3
      %p78 = por %p76, %p77
      %p79 = scmp.ne.s32.totalorder %s70, %s71
      %p80 = scmp.eq.s32.totalorder %s25, 0
      %p81 = por %p79, %p80
      %p82 = scmp.ne.s32.totalorder %s70, %s71
      %p83 = scmp.eq.s32.totalorder %s26, 3
      %p84 = por %p82, %p83
      %p86 = scmp.ne.s32.totalorder %s71, %s85
      %p87 = scmp.eq.s32.totalorder %s26, 0
      %p88 = por %p86, %p87
      %s90 = sadd.s32 %s89, 1
      %p93 = scmp.eq.s32.totalorder %s20, 3
      %p94 = scmp.ne.s32.totalorder %s89, %s91
      %p95 = scmp.eq.s32.totalorder %s20, 0
      %p96 = por %p94, %p95
      %p97 = scmp.ne.s32.totalorder %s89, %s91
      %p98 = scmp.eq.s32.totalorder %s25, 3
      %p99 = por %p97, %p98
      %p100 = scmp.ne.s32.totalorder %s91, %s92
      %p101 = scmp.eq.s32.totalorder %s25, 0
      %p102 = por %p100, %p101
      %p103 = scmp.ne.s32.totalorder %s91, %s92
      %p104 = scmp.eq.s32.totalorder %s26, 3
      %p105 = por %p103, %p104
      %p107 = scmp.ne.s32.totalorder %s92, %s106
      %p108 = scmp.eq.s32.totalorder %s26, 0
      %p109 = por %p107, %p108
      %s111 = sadd.s32 %s110, 1
      %p114 = scmp.eq.s32.totalorder %s20, 3
      %p115 = scmp.ne.s32.totalorder %s110, %s112
      %p116 = scmp.eq.s32.totalorder %s20, 0
      %p117 = por %p115, %p116
      %p118 = scmp.ne.s32.totalorder %s110, %s112
      %p119 = scmp.eq.s32.totalorder %s25, 3
      %p120 = por %p118, %p119
      %p121 = scmp.ne.s32.totalorder %s112, %s113
      %p122 = scmp.eq.s32.totalorder %s25, 0
      %p123 = por %p121, %p122
      %p124 = scmp.ne.s32.totalorder %s112, %s113
      %p125 = scmp.eq.s32.totalorder %s26, 3
      %p126 = por %p124, %p125
      %p128 = scmp.ne.s32.totalorder %s113, %s127
      %p129 = scmp.eq.s32.totalorder %s26, 0
      %p130 = por %p128, %p129
      %s132 = sadd.s32 %s131, 1
      %p135 = scmp.eq.s32.totalorder %s20, 3
      %p136 = scmp.ne.s32.totalorder %s131, %s133
      %p137 = scmp.eq.s32.totalorder %s20, 0
      %p138 = por %p136, %p137
      %p139 = scmp.ne.s32.totalorder %s131, %s133
      %p140 = scmp.eq.s32.totalorder %s25, 3
      %p141 = por %p139, %p140
      %p142 = scmp.ne.s32.totalorder %s133, %s134
      %p143 = scmp.eq.s32.totalorder %s25, 0
      %p144 = por %p142, %p143
      %p145 = scmp.ne.s32.totalorder %s133, %s134
      %p146 = scmp.eq.s32.totalorder %s26, 3
      %p147 = por %p145, %p146
      %p149 = scmp.ne.s32.totalorder %s134, %s148
      %p150 = scmp.eq.s32.totalorder %s26, 0
      %p151 = por %p149, %p150
      %s153 = sadd.s32 %s152, 1
      %p156 = scmp.eq.s32.totalorder %s20, 3
      %p157 = scmp.ne.s32.totalorder %s152, %s154
      %p158 = scmp.eq.s32.totalorder %s20, 0
      %p159 = por %p157, %p158
      %p160 = scmp.ne.s32.totalorder %s152, %s154
      %p161 = scmp.eq.s32.totalorder %s25, 3
      %p162 = por %p160, %p161
      %p163 = scmp.ne.s32.totalorder %s154, %s155
      %p164 = scmp.eq.s32.totalorder %s25, 0
      %p165 = por %p163, %p164
      %p166 = scmp.ne.s32.totalorder %s154, %s155
      %p167 = scmp.eq.s32.totalorder %s26, 3
      %p168 = por %p166, %p167
      %p170 = scmp.ne.s32.totalorder %s155, %s169
      %p171 = scmp.eq.s32.totalorder %s26, 0
      %p172 = por %p170, %p171
      %s174 = sadd.s32 %s173, 1
      %p177 = scmp.eq.s32.totalorder %s20, 3
      %p178 = scmp.ne.s32.totalorder %s173, %s175
      %p179 = scmp.eq.s32.totalorder %s20, 0
      %p180 = por %p178, %p179
      %p181 = scmp.ne.s32.totalorder %s173, %s175
      %p182 = scmp.eq.s32.totalorder %s25, 3
      %p183 = por %p181, %p182
      %p184 = scmp.ne.s32.totalorder %s175, %s176
      %p185 = scmp.eq.s32.totalorder %s25, 0
      %p186 = por %p184, %p185
      %p187 = scmp.ne.s32.totalorder %s175, %s176
      %p188 = scmp.eq.s32.totalorder %s26, 3
      %p189 = por %p187, %p188
      %p191 = scmp.ne.s32.totalorder %s176, %s190
      %p192 = scmp.eq.s32.totalorder %s26, 0
      %p193 = por %p191, %p192
      %s194 = ssub.s32 %s27, %s39
      %s195 = ssub.s32 %s28, %s35
      %s196 = sor.u32 %s194, %s195
      %p197 = scmp.eq.s32.totalorder %s196, 0
      %s199 = sadd.s32 %s198, 1
      %s200 = scalar_select %p197, %s198, %s199
      %p203 = pneg %p197
      %p204 = scmp.eq.s32.totalorder %s20, 3
      %p205 = por %p203, %p204
      %p206 = scmp.ne.s32.totalorder %s198, %s201
      %p207 = scmp.eq.s32.totalorder %s20, 0
      %p208 = por %p206, %p207
      %p209 = scmp.ne.s32.totalorder %s198, %s201
      %p210 = scmp.eq.s32.totalorder %s25, 3
      %p211 = por %p209, %p210
      %p212 = scmp.ne.s32.totalorder %s201, %s202
      %p213 = scmp.eq.s32.totalorder %s25, 0
      %p214 = por %p212, %p213
      %p215 = scmp.ne.s32.totalorder %s201, %s202
      %p216 = scmp.eq.s32.totalorder %s26, 3
      %p217 = por %p215, %p216
      %p219 = scmp.ne.s32.totalorder %s202, %s218
      %p220 = scmp.eq.s32.totalorder %s26, 0
      %p221 = por %p219, %p220
      %s222 = ssub.s32 %s27, %s39
      %s223 = ssub.s32 %s28, %s35
      %s224 = sor.u32 %s222, %s223
      %p225 = scmp.eq.s32.totalorder %s224, 0
      %s227 = sadd.s32 %s226, 1
      %s228 = scalar_select %p225, %s226, %s227
      %p231 = pneg %p225
      %p232 = scmp.eq.s32.totalorder %s20, 3
      %p233 = por %p231, %p232
      %p234 = scmp.ne.s32.totalorder %s226, %s229
      %p235 = scmp.eq.s32.totalorder %s20, 0
      %p236 = por %p234, %p235
      %p237 = scmp.ne.s32.totalorder %s226, %s229
      %p238 = scmp.eq.s32.totalorder %s25, 3
      %p239 = por %p237, %p238
      %p240 = scmp.ne.s32.totalorder %s229, %s230
      %p241 = scmp.eq.s32.totalorder %s25, 0
      %p242 = por %p240, %p241
      %p243 = scmp.ne.s32.totalorder %s229, %s230
      %p244 = scmp.eq.s32.totalorder %s26, 3
      %p245 = por %p243, %p244
      %p247 = scmp.ne.s32.totalorder %s230, %s246
      %p248 = scmp.eq.s32.totalorder %s26, 0
      %p249 = por %p247, %p248
      %s250 = ssub.s32 %s27, %s39
      %s251 = ssub.s32 %s28, %s35
      %s252 = sor.u32 %s250, %s251
      %p253 = scmp.eq.s32.totalorder %s252, 0
      %s255 = sadd.s32 %s254, 1
      %s256 = scalar_select %p253, %s254, %s255
      %p259 = pneg %p253
      %p260 = scmp.eq.s32.totalorder %s20, 3
      %p261 = por %p259, %p260
      %p262 = scmp.ne.s32.totalorder %s254, %s257
      %p263 = scmp.eq.s32.totalorder %s20, 0
      %p264 = por %p262, %p263
      %p265 = scmp.ne.s32.totalorder %s254, %s257
      %p266 = scmp.eq.s32.totalorder %s25, 3
      %p267 = por %p265, %p266
      %p268 = scmp.ne.s32.totalorder %s257, %s258
      %p269 = scmp.eq.s32.totalorder %s25, 0
      %p270 = por %p268, %p269
      %p271 = scmp.ne.s32.totalorder %s257, %s258
      %p272 = scmp.eq.s32.totalorder %s26, 3
      %p273 = por %p271, %p272
      %p275 = scmp.ne.s32.totalorder %s258, %s274
      %p276 = scmp.eq.s32.totalorder %s26, 0
      %p277 = por %p275, %p276
      %p278 = scmp.le.s32.totalorder 1, %s20
      %p279 = scmp.lt.s32.totalorder %s20, 5
      %p280 = pnand %p278, %p279
      %p281 = pneg %p280
      // Predicated region
      $region9: #{tpu_custom_call.1} parent=5 // pred_check
        _
      $region10: #{tpu_custom_call.1} parent=5 // pred_check_branch
        %283 = sbr.rel (%p280) target = $region12
      $region11: #{tpu_custom_call.1} parent=5 // pred_region
        %s284 = ssub.s32 %s20, 1
        // Predicated region
        $region13: #{tpu_custom_call.1} parent=11 // pred_check
          %p285 = pneg %p81
        $region14: #{tpu_custom_call.1} parent=11 // pred_check_branch
          %287 = sbr.rel (%p285) target = $region16
        $region15: #{tpu_custom_call.1} parent=11 // pred_region
          %s289 = ssub.s32 256, 256
          %290 = vsyncadd [#allocation5], %s289
          %s291 = sshll.u32 [#allocation4], 4
          %s292 = int_to_ptr.vmem [resolvable:$true] %s291
          %297 = dma.hbm_to_vmem [thread:$0]  %s1, 256, %s292, [#allocation5], 64, 64, 4
        $region16: #{tpu_custom_call.1} parent=11 // pred_fallthru
          _
        // Predicated region
        $region17: #{tpu_custom_call.1} parent=11 // pred_check
          %p298 = pneg %p102
        $region18: #{tpu_custom_call.1} parent=11 // pred_check_branch
          %300 = sbr.rel (%p298) target = $region20
        $region19: #{tpu_custom_call.1} parent=11 // pred_region
          _
        $region20: #{tpu_custom_call.1} parent=11 // pred_fallthru
          _
        // Predicated region
        $region21: #{tpu_custom_call.1} parent=11 // pred_check
          %p301 = pneg %p123
        $region22: #{tpu_custom_call.1} parent=11 // pred_check_branch
          %303 = sbr.rel (%p301) target = $region24
        $region23: #{tpu_custom_call.1} parent=11 // pred_region
          %s305 = ssub.s32 256, 256
          %306 = vsyncadd [#allocation5], %s305
          %s307 = sshll.u32 [#allocation6], 4
          %s308 = int_to_ptr.vmem [resolvable:$true] %s307
          %313 = dma.hbm_to_vmem [thread:$0]  %s3, 256, %s308, [#allocation5], 64, 64, 4
        $region24: #{tpu_custom_call.1} parent=11 // pred_fallthru
          _
        // Predicated region
        $region25: #{tpu_custom_call.1} parent=11 // pred_check
          %p314 = pneg %p144
        $region26: #{tpu_custom_call.1} parent=11 // pred_check_branch
          %316 = sbr.rel (%p314) target = $region28
        $region27: #{tpu_custom_call.1} parent=11 // pred_region
          _
        $region28: #{tpu_custom_call.1} parent=11 // pred_fallthru
          _
        // Predicated region
        $region29: #{tpu_custom_call.1} parent=11 // pred_check
          %p317 = pneg %p165
        $region30: #{tpu_custom_call.1} parent=11 // pred_check_branch
          %319 = sbr.rel (%p317) target = $region32
        $region31: #{tpu_custom_call.1} parent=11 // pred_region
          _
        $region32: #{tpu_custom_call.1} parent=11 // pred_fallthru
          _
        // Predicated region
        $region33: #{tpu_custom_call.1} parent=11 // pred_check
          %p320 = pneg %p186
        $region34: #{tpu_custom_call.1} parent=11 // pred_check_branch
          %322 = sbr.rel (%p320) target = $region36
        $region35: #{tpu_custom_call.1} parent=11 // pred_region
          _
        $region36: #{tpu_custom_call.1} parent=11 // pred_fallthru
          _
      $region12: #{tpu_custom_call.1} parent=5 // pred_fallthru
        _
      %p323 = scmp.lt.s32.totalorder %s20, 4
      // Predicated region
      $region37: #{tpu_custom_call.1} parent=5 // pred_check
        %p324 = pneg %p323
      $region38: #{tpu_custom_call.1} parent=5 // pred_check_branch
        %326 = sbr.rel (%p324) target = $region40
      $region39: #{tpu_custom_call.1} parent=5 // pred_region
        // Predicated region
        $region41: #{tpu_custom_call.1} parent=39 // pred_check
          %p327 = pneg %p54
        $region42: #{tpu_custom_call.1} parent=39 // pred_check_branch
          %329 = sbr.rel (%p327) target = $region44
        $region43: #{tpu_custom_call.1} parent=39 // pred_region
          %s330 = sand.u32 %s44, 1
          %s331 = scalar_lea.sflag [#allocation3], %s330
          %s332 = sand.u32 %s44, 1
          %s333 = smul.addr %s332, 8
          %s334 = scalar_lea.vmem [#allocation2], %s333
          %s335 = smul.u32 2, %s28
          %s337 = ssub.s32 128, 128
          %338 = vsyncadd %s331, %s337
          %s339 = smul.addr %s27, 4
          %s340 = sadd.s32 %s335, %s339
          %s341 = smul.addr %s340, 64
          %s342 = scalar_lea.hbm %s0, %s341
          %s343 = sshll.u32 %s334, 4
          %s344 = int_to_ptr.vmem [resolvable:$true] %s343
          %349 = dma.hbm_to_vmem [thread:$0]  %s342, 128, %s344, %s331, 64, 64, 4
        $region44: #{tpu_custom_call.1} parent=39 // pred_fallthru
          _
      $region40: #{tpu_custom_call.1} parent=5 // pred_fallthru
        _
      %p350 = scmp.le.s32.totalorder 1, %s20
      %p351 = scmp.lt.s32.totalorder %s20, 5
      %p352 = pnand %p350, %p351
      %p353 = pneg %p352
      // Predicated region
      $region45: #{tpu_custom_call.1} parent=5 // pred_check
        _
      $region46: #{tpu_custom_call.1} parent=5 // pred_check_branch
        %355 = sbr.rel (%p352) target = $region48
      $region47: #{tpu_custom_call.1} parent=5 // pred_region
        %s356 = ssub.s32 %s20, 1
        %s357 = sand.u32 %s47, 1
        %s358 = scalar_lea.sflag [#allocation3], %s357
        %s359 = sand.u32 %s47, 1
        %s360 = smul.addr %s359, 8
        %s361 = scalar_lea.vmem [#allocation2], %s360
        // Predicated region
        $region49: #{tpu_custom_call.1} parent=47 // pred_check
          %p362 = pneg %p60
        $region50: #{tpu_custom_call.1} parent=47 // pred_check_branch
          %364 = sbr.rel (%p362) target = $region52
        $region51: #{tpu_custom_call.1} parent=47 // pred_region
          %365 = dma.done %s358, 128
        $region52: #{tpu_custom_call.1} parent=47 // pred_fallthru
          _
        // Predicated region
        $region53: #{tpu_custom_call.1} parent=47 // pred_check
          %p366 = pneg %p81
        $region54: #{tpu_custom_call.1} parent=47 // pred_check_branch
          %368 = sbr.rel (%p366) target = $region56
        $region55: #{tpu_custom_call.1} parent=47 // pred_region
          %369 = dma.done [#allocation5], 256
        $region56: #{tpu_custom_call.1} parent=47 // pred_fallthru
          _
        // Predicated region
        $region57: #{tpu_custom_call.1} parent=47 // pred_check
          %p370 = pneg %p123
        $region58: #{tpu_custom_call.1} parent=47 // pred_check_branch
          %372 = sbr.rel (%p370) target = $region60
        $region59: #{tpu_custom_call.1} parent=47 // pred_region
          %373 = dma.done [#allocation5], 256
        $region60: #{tpu_custom_call.1} parent=47 // pred_fallthru
          _
        %s374 = sand.u32 %s47, 1
        %s375 = scalar_lea.sflag [#allocation3], %s374
        %s376 = sand.u32 %s47, 1
        %s377 = smul.addr %s376, 8
        %s378 = scalar_lea.vmem [#allocation2], %s377
        %p379 = pneg %p60
        %p380 = pneg %p57
        %p381 = pneg %p81
        %p382 = pneg %p78
        %p383 = pneg %p102
        %p384 = pneg %p99
        %p385 = pneg %p123
        %p386 = pneg %p120
        %p387 = pneg %p144
        %p388 = pneg %p141
        %p389 = pneg %p165
        %p390 = pneg %p162
        %p391 = pneg %p186
        %p392 = pneg %p183
        %p393 = pneg %p214
        %p394 = pneg %p211
        %s395 = sand.u32 %s201, 1
        %s396 = sand.u32 %s201, 1
        %s397 = smul.addr %s396, 32
        %s398 = scalar_lea.vmem [#allocation7], %s397
        %p399 = pneg %p242
        %p400 = pneg %p239
        %s401 = sand.u32 %s229, 1
        %s402 = sand.u32 %s229, 1
        %s403 = smul.addr %s402, 32
        %s404 = scalar_lea.vmem [#allocation8], %s403
        %p405 = pneg %p270
        %p406 = pneg %p267
        %s407 = sand.u32 %s257, 1
        %s408 = sand.u32 %s257, 1
        %s409 = smul.addr %s408, 32
        %s410 = scalar_lea.vmem [#allocation9], %s409
        %s411 = smul.u32 2, %s30
        %s412 = smul.u32 2, %s30
        %s413 = smul.u32 2, %s30
        %s414 = smul.u32 2, %s30
        %v416 = vld [vmem:[%s361] sm:$0xf]
        %v417 = vld [vmem:[%s361 + $0x4] sm:$0xf]
        %v418 = vld [vmem:[#allocation4] sm:$0xf]
        %v419 = vld [vmem:[#allocation4 + $0x4] sm:$0xf]
        %v420 = vld [vmem:[#allocation4 + $0x8] sm:$0xf]
        %v421 = vld [vmem:[#allocation4 + $0xc] sm:$0xf]
        %v422 = vld [vmem:[%s2] sm:$0x1]
        %v424 = vlaneseq
        %v425 = vshrl.u32 %v424, 7
        %v426 = vsub.s32 0, %v425
        %v427 = vrot.slane %v422, %v426
        %v431 = vunpack.c.l.b16 %v416
        %v432 = vunpack.c.l.b16 %v417
        %v433 = vpack.c.b16 %v432, %v431
        %v438 = vunpack.c.l.b16 %v418
        %v439 = vunpack.c.l.b16 %v419
        %v440 = vunpack.c.l.b16 %v420
        %v441 = vunpack.c.l.b16 %v421
        %v442 = vpack.c.b16 %v439, %v438
        %v443 = vpack.c.b16 %v441, %v440
        %vm446 = vcmask 261120
        %v448 = vsel %vm446, %v433, 0
        %450 = vmatprep.subr.bf16.mxu0 0
        %451 = vmatpush1.bf16.msra.mxu0 %v442
        %452 = vmatprep.subr.bf16.mxu0 0
        %453 = vmatpush1.bf16.msra.mxu0 %v443
        %454 = vmatprep.subr.bf16.mxu0 0
        %455 = vmatpush1.bf16.msra.mxu0 0
        %456 = vmatprep.subr.bf16.mxu0 0
        %457 = vmatpush1.bf16.msra.mxu0 0
        %458 = vmatprep.subr.bf16.mxu0 0
        %459 = vmatpush1.bf16.msra.mxu0 0
        %460 = vmatprep.subr.bf16.mxu0 0
        %461 = vmatpush1.bf16.msra.mxu0 0
        %462 = vmatprep.subr.bf16.mxu0 0
        %463 = vmatpush1.bf16.msra.mxu0 0
        %464 = vmatprep.subr.bf16.mxu0 0
        %465 = vmatpush1.bf16.msra.mxu0 0
        %466 = vmatprep.subr.bf16.mxu0 0
        %467 = vmatpush1.bf16.msra.mxu0 0
        %468 = vmatprep.subr.bf16.mxu0 0
        %469 = vmatpush1.bf16.msra.mxu0 0
        %470 = vmatprep.subr.bf16.mxu0 0
        %471 = vmatpush1.bf16.msra.mxu0 0
        %472 = vmatprep.subr.bf16.mxu0 0
        %473 = vmatpush1.bf16.msra.mxu0 0
        %474 = vmatprep.subr.bf16.mxu0 0
        %475 = vmatpush1.bf16.msra.mxu0 0
        %476 = vmatprep.subr.bf16.mxu0 0
        %477 = vmatpush1.bf16.msra.mxu0 0
        %478 = vmatprep.subr.bf16.mxu0 0
        %479 = vmatpush1.bf16.msra.mxu0 0
        %480 = vmatprep.subr.bf16.mxu0 0
        %481 = vmatpush1.bf16.msra.mxu0 0
        %482 = vmatprep.mubr.bf16.mxu0 0
        %483 = vmatmul.mubr.bf16.gmra.mrb[0].mxu0 %v448
        %v484 = vpop.f32.mrb[0].mxu0
        %v485 = vadd.f32 %v427, %v484
        %v486 = vpop.f32.mrb[0].mxu0
        %v487 = vpop.f32.mrb[0].mxu0
        %v488 = vadd.f32 %v427, %v487
        %v489 = vpop.f32.mrb[0].mxu0
        %490 = vdwg.mxu0
        %493 = vrot.lane.b32.xlu0 %v485, 120
        %v494 = vpop.permute.xlu0 %493
        %495 = vrot.lane.b32.xlu0 %v488, 120
        %v496 = vpop.permute.xlu0 %495
        %499 = vrot.lane.b32.xlu0 %v485, 112
        %v500 = vpop.permute.xlu0 %499
        %501 = vrot.lane.b32.xlu0 %v488, 112
        %v502 = vpop.permute.xlu0 %501
        %505 = vrot.lane.b32.xlu0 %v485, 104
        %v506 = vpop.permute.xlu0 %505
        %507 = vrot.lane.b32.xlu0 %v488, 104
        %v508 = vpop.permute.xlu0 %507
        %v511 = vcombine.low %v485, %v500
        %v512 = vcombine.high %v485, %v500
        %v514 = vunpack.c.l.s4 1983009808
        %v515 = vunpack.c.0.s8 %v514
        %v516 = vlaneseq
        %v517 = vshrl.u32 %v516, 7
        %v518 = vsub.s32 %v515, %v517
        %v519 = vrot.slane %v511, %v518
        %v521 = vunpack.c.l.s4 1983009808
        %v522 = vunpack.c.0.s8 %v521
        %v523 = vlaneseq
        %v524 = vshrl.u32 %v523, 7
        %v525 = vsub.s32 %v522, %v524
        %v526 = vrot.slane %v512, %v525
        %v527 = vcombine.low %v494, %v506
        %v528 = vcombine.high %v494, %v506
        %v530 = vunpack.c.l.s4 1983009808
        %v531 = vunpack.c.0.s8 %v530
        %v532 = vlaneseq
        %v533 = vshrl.u32 %v532, 7
        %v534 = vsub.s32 %v531, %v533
        %v535 = vrot.slane %v527, %v534
        %v537 = vunpack.c.l.s4 1983009808
        %v538 = vunpack.c.0.s8 %v537
        %v539 = vlaneseq
        %v540 = vshrl.u32 %v539, 7
        %v541 = vsub.s32 %v538, %v540
        %v542 = vrot.slane %v528, %v541
        %v543 = vcombine.low %v519, %v535
        %v544 = vcombine.high %v519, %v535
        %v546 = vunpack.c.l.s4 1934713408
        %v547 = vunpack.c.0.s8 %v546
        %v548 = vlaneseq
        %v549 = vshrl.u32 %v548, 7
        %v550 = vsub.s32 %v547, %v549
        %v551 = vrot.slane %v543, %v550
        %v553 = vunpack.c.l.s4 1934713408
        %v554 = vunpack.c.0.s8 %v553
        %v555 = vlaneseq
        %v556 = vshrl.u32 %v555, 7
        %v557 = vsub.s32 %v554, %v556
        %v558 = vrot.slane %v544, %v557
        %v559 = vcombine.low %v526, %v542
        %v560 = vcombine.high %v526, %v542
        %v562 = vunpack.c.l.s4 1934713408
        %v563 = vunpack.c.0.s8 %v562
        %v564 = vlaneseq
        %v565 = vshrl.u32 %v564, 7
        %v566 = vsub.s32 %v563, %v565
        %v567 = vrot.slane %v559, %v566
        %v569 = vunpack.c.l.s4 1934713408
        %v570 = vunpack.c.0.s8 %v569
        %v571 = vlaneseq
        %v572 = vshrl.u32 %v571, 7
        %v573 = vsub.s32 %v570, %v572
        %v574 = vrot.slane %v560, %v573
        %v575 = vcombine.high %v551, 0.0
        %v576 = vcombine.high %v558, 0.0
        %v577 = vcombine.high %v567, 0.0
        %v578 = vcombine.high %v574, 0.0
        %v579 = vcombine.low %v488, %v502
        %v580 = vcombine.high %v488, %v502
        %v582 = vunpack.c.l.s4 1983009808
        %v583 = vunpack.c.0.s8 %v582
        %v584 = vlaneseq
        %v585 = vshrl.u32 %v584, 7
        %v586 = vsub.s32 %v583, %v585
        %v587 = vrot.slane %v579, %v586
        %v589 = vunpack.c.l.s4 1983009808
        %v590 = vunpack.c.0.s8 %v589
        %v591 = vlaneseq
        %v592 = vshrl.u32 %v591, 7
        %v593 = vsub.s32 %v590, %v592
        %v594 = vrot.slane %v580, %v593
        %v595 = vcombine.low %v496, %v508
        %v596 = vcombine.high %v496, %v508
        %v598 = vunpack.c.l.s4 1983009808
        %v599 = vunpack.c.0.s8 %v598
        %v600 = vlaneseq
        %v601 = vshrl.u32 %v600, 7
        %v602 = vsub.s32 %v599, %v601
        %v603 = vrot.slane %v595, %v602
        %v605 = vunpack.c.l.s4 1983009808
        %v606 = vunpack.c.0.s8 %v605
        %v607 = vlaneseq
        %v608 = vshrl.u32 %v607, 7
        %v609 = vsub.s32 %v606, %v608
        %v610 = vrot.slane %v596, %v609
        %v611 = vcombine.low %v587, %v603
        %v612 = vcombine.high %v587, %v603
        %v614 = vunpack.c.l.s4 1934713408
        %v615 = vunpack.c.0.s8 %v614
        %v616 = vlaneseq
        %v617 = vshrl.u32 %v616, 7
        %v618 = vsub.s32 %v615, %v617
        %v619 = vrot.slane %v611, %v618
        %v621 = vunpack.c.l.s4 1934713408
        %v622 = vunpack.c.0.s8 %v621
        %v623 = vlaneseq
        %v624 = vshrl.u32 %v623, 7
        %v625 = vsub.s32 %v622, %v624
        %v626 = vrot.slane %v612, %v625
        %v627 = vcombine.low %v594, %v610
        %v628 = vcombine.high %v594, %v610
        %v630 = vunpack.c.l.s4 1934713408
        %v631 = vunpack.c.0.s8 %v630
        %v632 = vlaneseq
        %v633 = vshrl.u32 %v632, 7
        %v634 = vsub.s32 %v631, %v633
        %v635 = vrot.slane %v627, %v634
        %v637 = vunpack.c.l.s4 1934713408
        %v638 = vunpack.c.0.s8 %v637
        %v639 = vlaneseq
        %v640 = vshrl.u32 %v639, 7
        %v641 = vsub.s32 %v638, %v640
        %v642 = vrot.slane %v628, %v641
        %v643 = vcombine.high %v619, 0.0
        %v644 = vcombine.high %v626, 0.0
        %v645 = vcombine.high %v635, 0.0
        %v646 = vcombine.high %v642, 0.0
        %v647 = vcombine.low %v551, %v558
        %v649 = vunpack.c.l.s4 1983009808
        %v650 = vunpack.c.0.s8 %v649
        %v651 = vlaneseq
        %v652 = vshrl.u32 %v651, 7
        %v653 = vsub.s32 %v650, %v652
        %v654 = vrot.slane %v647, %v653
        %v655 = vcombine.low %v575, %v576
        %v657 = vunpack.c.l.s4 1983009808
        %v658 = vunpack.c.0.s8 %v657
        %v659 = vlaneseq
        %v660 = vshrl.u32 %v659, 7
        %v661 = vsub.s32 %v658, %v660
        %v662 = vrot.slane %v655, %v661
        %v663 = vcombine.low %v567, %v574
        %v665 = vunpack.c.l.s4 1983009808
        %v666 = vunpack.c.0.s8 %v665
        %v667 = vlaneseq
        %v668 = vshrl.u32 %v667, 7
        %v669 = vsub.s32 %v666, %v668
        %v670 = vrot.slane %v663, %v669
        %v671 = vcombine.low %v577, %v578
        %v673 = vunpack.c.l.s4 1983009808
        %v674 = vunpack.c.0.s8 %v673
        %v675 = vlaneseq
        %v676 = vshrl.u32 %v675, 7
        %v677 = vsub.s32 %v674, %v676
        %v678 = vrot.slane %v671, %v677
        %v679 = vcombine.low %v654, %v662
        %v680 = vcombine.high %v654, %v662
        %v682 = vunpack.c.l.s4 1934713408
        %v683 = vunpack.c.0.s8 %v682
        %v684 = vlaneseq
        %v685 = vshrl.u32 %v684, 7
        %v686 = vsub.s32 %v683, %v685
        %v687 = vrot.slane %v679, %v686
        %v689 = vunpack.c.l.s4 1934713408
        %v690 = vunpack.c.0.s8 %v689
        %v691 = vlaneseq
        %v692 = vshrl.u32 %v691, 7
        %v693 = vsub.s32 %v690, %v692
        %v694 = vrot.slane %v680, %v693
        %v695 = vcombine.low %v670, %v678
        %v696 = vcombine.high %v670, %v678
        %v698 = vunpack.c.l.s4 1934713408
        %v699 = vunpack.c.0.s8 %v698
        %v700 = vlaneseq
        %v701 = vshrl.u32 %v700, 7
        %v702 = vsub.s32 %v699, %v701
        %v703 = vrot.slane %v695, %v702
        %v705 = vunpack.c.l.s4 1934713408
        %v706 = vunpack.c.0.s8 %v705
        %v707 = vlaneseq
        %v708 = vshrl.u32 %v707, 7
        %v709 = vsub.s32 %v706, %v708
        %v710 = vrot.slane %v696, %v709
        %v711 = vcombine.low %v687, %v703
        %v712 = vcombine.high %v687, %v703
        %v713 = vcombine.low %v694, %v710
        %v714 = vcombine.high %v694, %v710
        %v715 = vcombine.low %v619, %v626
        %v717 = vunpack.c.l.s4 1983009808
        %v718 = vunpack.c.0.s8 %v717
        %v719 = vlaneseq
        %v720 = vshrl.u32 %v719, 7
        %v721 = vsub.s32 %v718, %v720
        %v722 = vrot.slane %v715, %v721
        %v723 = vcombine.low %v643, %v644
        %v725 = vunpack.c.l.s4 1983009808
        %v726 = vunpack.c.0.s8 %v725
        %v727 = vlaneseq
        %v728 = vshrl.u32 %v727, 7
        %v729 = vsub.s32 %v726, %v728
        %v730 = vrot.slane %v723, %v729
        %v731 = vcombine.low %v635, %v642
        %v733 = vunpack.c.l.s4 1983009808
        %v734 = vunpack.c.0.s8 %v733
        %v735 = vlaneseq
        %v736 = vshrl.u32 %v735, 7
        %v737 = vsub.s32 %v734, %v736
        %v738 = vrot.slane %v731, %v737
        %v739 = vcombine.low %v645, %v646
        %v741 = vunpack.c.l.s4 1983009808
        %v742 = vunpack.c.0.s8 %v741
        %v743 = vlaneseq
        %v744 = vshrl.u32 %v743, 7
        %v745 = vsub.s32 %v742, %v744
        %v746 = vrot.slane %v739, %v745
        %v747 = vcombine.low %v722, %v730
        %v748 = vcombine.high %v722, %v730
        %v750 = vunpack.c.l.s4 1934713408
        %v751 = vunpack.c.0.s8 %v750
        %v752 = vlaneseq
        %v753 = vshrl.u32 %v752, 7
        %v754 = vsub.s32 %v751, %v753
        %v755 = vrot.slane %v747, %v754
        %v757 = vunpack.c.l.s4 1934713408
        %v758 = vunpack.c.0.s8 %v757
        %v759 = vlaneseq
        %v760 = vshrl.u32 %v759, 7
        %v761 = vsub.s32 %v758, %v760
        %v762 = vrot.slane %v748, %v761
        %v763 = vcombine.low %v738, %v746
        %v764 = vcombine.high %v738, %v746
        %v766 = vunpack.c.l.s4 1934713408
        %v767 = vunpack.c.0.s8 %v766
        %v768 = vlaneseq
        %v769 = vshrl.u32 %v768, 7
        %v770 = vsub.s32 %v767, %v769
        %v771 = vrot.slane %v763, %v770
        %v773 = vunpack.c.l.s4 1934713408
        %v774 = vunpack.c.0.s8 %v773
        %v775 = vlaneseq
        %v776 = vshrl.u32 %v775, 7
        %v777 = vsub.s32 %v774, %v776
        %v778 = vrot.slane %v764, %v777
        %v779 = vcombine.low %v755, %v771
        %v780 = vcombine.high %v755, %v771
        %v781 = vcombine.low %v762, %v778
        %v782 = vcombine.high %v762, %v778
        %v783 = vpack.c.bf16 %v779, %v711
        %v784 = vpack.c.bf16 %v780, %v712
        %v785 = vpack.c.bf16 %v781, %v713
        %v786 = vpack.c.bf16 %v782, %v714
        %v791 = vunpack.c.l.b16 %v783
        %v792 = vunpack.c.h.b16 %v783
        %v793 = vunpack.c.l.b16 %v784
        %v794 = vunpack.c.h.b16 %v784
        %v795 = vunpack.c.l.b16 %v785
        %v796 = vunpack.c.h.b16 %v785
        %v797 = vunpack.c.l.b16 %v786
        %v798 = vunpack.c.h.b16 %v786
        %v799 = vpack.c.b16 %v791, %v791
        %v800 = vpack.c.b16 %v792, %v792
        %v801 = vpack.c.b16 %v793, %v793
        %v802 = vpack.c.b16 %v794, %v794
        %v803 = vpack.c.b16 %v795, %v795
        %v804 = vpack.c.b16 %v796, %v796
        %v805 = vpack.c.b16 %v797, %v797
        %v806 = vpack.c.b16 %v798, %v798
        %vm815 = vcmask 60416
        %816 = vst.msk [vmem:[%s398] sm:$0xf] %vm815, %v799
        %817 = vst.msk [vmem:[%s398 + $0x4] sm:$0xf] %vm815, %v800
        %818 = vst.msk [vmem:[%s398 + $0x8] sm:$0xf] %vm815, %v801
        %819 = vst.msk [vmem:[%s398 + $0xc] sm:$0xf] %vm815, %v802
        %820 = vst.msk [vmem:[%s398 + $0x10] sm:$0xf] %vm815, %v803
        %821 = vst.msk [vmem:[%s398 + $0x14] sm:$0xf] %vm815, %v804
        %822 = vst.msk [vmem:[%s398 + $0x18] sm:$0xf] %vm815, %v805
        %823 = vst.msk [vmem:[%s398 + $0x1c] sm:$0xf] %vm815, %v806
        %v824 = vld [vmem:[#allocation6] sm:$0xf]
        %v825 = vld [vmem:[#allocation6 + $0x4] sm:$0xf]
        %v826 = vld [vmem:[#allocation6 + $0x8] sm:$0xf]
        %v827 = vld [vmem:[#allocation6 + $0xc] sm:$0xf]
        %v828 = vld [vmem:[%s4] sm:$0x1]
        %v830 = vlaneseq
        %v831 = vshrl.u32 %v830, 7
        %v832 = vsub.s32 0, %v831
        %v833 = vrot.slane %v828, %v832
        %v839 = vunpack.c.l.b16 %v824
        %v840 = vunpack.c.l.b16 %v825
        %v841 = vunpack.c.l.b16 %v826
        %v842 = vunpack.c.l.b16 %v827
        %v843 = vpack.c.b16 %v840, %v839
        %v844 = vpack.c.b16 %v842, %v841
        %847 = vmatprep.subr.bf16.mxu0 0
        %848 = vmatpush1.bf16.msra.mxu0 %v843
        %849 = vmatprep.subr.bf16.mxu0 0
        %850 = vmatpush1.bf16.msra.mxu0 %v844
        %851 = vmatprep.subr.bf16.mxu0 0
        %852 = vmatpush1.bf16.msra.mxu0 0
        %853 = vmatprep.subr.bf16.mxu0 0
        %854 = vmatpush1.bf16.msra.mxu0 0
        %855 = vmatprep.subr.bf16.mxu0 0
        %856 = vmatpush1.bf16.msra.mxu0 0
        %857 = vmatprep.subr.bf16.mxu0 0
        %858 = vmatpush1.bf16.msra.mxu0 0
        %859 = vmatprep.subr.bf16.mxu0 0
        %860 = vmatpush1.bf16.msra.mxu0 0
        %861 = vmatprep.subr.bf16.mxu0 0
        %862 = vmatpush1.bf16.msra.mxu0 0
        %863 = vmatprep.subr.bf16.mxu0 0
        %864 = vmatpush1.bf16.msra.mxu0 0
        %865 = vmatprep.subr.bf16.mxu0 0
        %866 = vmatpush1.bf16.msra.mxu0 0
        %867 = vmatprep.subr.bf16.mxu0 0
        %868 = vmatpush1.bf16.msra.mxu0 0
        %869 = vmatprep.subr.bf16.mxu0 0
        %870 = vmatpush1.bf16.msra.mxu0 0
        %871 = vmatprep.subr.bf16.mxu0 0
        %872 = vmatpush1.bf16.msra.mxu0 0
        %873 = vmatprep.subr.bf16.mxu0 0
        %874 = vmatpush1.bf16.msra.mxu0 0
        %875 = vmatprep.subr.bf16.mxu0 0
        %876 = vmatpush1.bf16.msra.mxu0 0
        %877 = vmatprep.subr.bf16.mxu0 0
        %878 = vmatpush1.bf16.msra.mxu0 0
        %879 = vmatprep.mubr.bf16.mxu0 0
        %880 = vmatmul.mubr.bf16.gmra.mrb[0].mxu0 %v448
        %v881 = vpop.f32.mrb[0].mxu0
        %v882 = vadd.f32 %v833, %v881
        %v883 = vpop.f32.mrb[0].mxu0
        %v884 = vpop.f32.mrb[0].mxu0
        %v885 = vadd.f32 %v833, %v884
        %v886 = vpop.f32.mrb[0].mxu0
        %887 = vdwg.mxu0
        %890 = vrot.lane.b32.xlu0 %v882, 120
        %v891 = vpop.permute.xlu0 %890
        %892 = vrot.lane.b32.xlu0 %v885, 120
        %v893 = vpop.permute.xlu0 %892
        %896 = vrot.lane.b32.xlu0 %v882, 112
        %v897 = vpop.permute.xlu0 %896
        %898 = vrot.lane.b32.xlu0 %v885, 112
        %v899 = vpop.permute.xlu0 %898
        %902 = vrot.lane.b32.xlu0 %v882, 104
        %v903 = vpop.permute.xlu0 %902
        %904 = vrot.lane.b32.xlu0 %v885, 104
        %v905 = vpop.permute.xlu0 %904
        %v908 = vcombine.low %v882, %v897
        %v909 = vcombine.high %v882, %v897
        %v911 = vunpack.c.l.s4 1983009808
        %v912 = vunpack.c.0.s8 %v911
        %v913 = vlaneseq
        %v914 = vshrl.u32 %v913, 7
        %v915 = vsub.s32 %v912, %v914
        %v916 = vrot.slane %v908, %v915
        %v918 = vunpack.c.l.s4 1983009808
        %v919 = vunpack.c.0.s8 %v918
        %v920 = vlaneseq
        %v921 = vshrl.u32 %v920, 7
        %v922 = vsub.s32 %v919, %v921
        %v923 = vrot.slane %v909, %v922
        %v924 = vcombine.low %v891, %v903
        %v925 = vcombine.high %v891, %v903
        %v927 = vunpack.c.l.s4 1983009808
        %v928 = vunpack.c.0.s8 %v927
        %v929 = vlaneseq
        %v930 = vshrl.u32 %v929, 7
        %v931 = vsub.s32 %v928, %v930
        %v932 = vrot.slane %v924, %v931
        %v934 = vunpack.c.l.s4 1983009808
        %v935 = vunpack.c.0.s8 %v934
        %v936 = vlaneseq
        %v937 = vshrl.u32 %v936, 7
        %v938 = vsub.s32 %v935, %v937
        %v939 = vrot.slane %v925, %v938
        %v940 = vcombine.low %v916, %v932
        %v941 = vcombine.high %v916, %v932
        %v943 = vunpack.c.l.s4 1934713408
        %v944 = vunpack.c.0.s8 %v943
        %v945 = vlaneseq
        %v946 = vshrl.u32 %v945, 7
        %v947 = vsub.s32 %v944, %v946
        %v948 = vrot.slane %v940, %v947
        %v950 = vunpack.c.l.s4 1934713408
        %v951 = vunpack.c.0.s8 %v950
        %v952 = vlaneseq
        %v953 = vshrl.u32 %v952, 7
        %v954 = vsub.s32 %v951, %v953
        %v955 = vrot.slane %v941, %v954
        %v956 = vcombine.low %v923, %v939
        %v957 = vcombine.high %v923, %v939
        %v959 = vunpack.c.l.s4 1934713408
        %v960 = vunpack.c.0.s8 %v959
        %v961 = vlaneseq
        %v962 = vshrl.u32 %v961, 7
        %v963 = vsub.s32 %v960, %v962
        %v964 = vrot.slane %v956, %v963
        %v966 = vunpack.c.l.s4 1934713408
        %v967 = vunpack.c.0.s8 %v966
        %v968 = vlaneseq
        %v969 = vshrl.u32 %v968, 7
        %v970 = vsub.s32 %v967, %v969
        %v971 = vrot.slane %v957, %v970
        %v972 = vcombine.high %v948, 0.0
        %v973 = vcombine.high %v955, 0.0
        %v974 = vcombine.high %v964, 0.0
        %v975 = vcombine.high %v971, 0.0
        %v976 = vcombine.low %v885, %v899
        %v977 = vcombine.high %v885, %v899
        %v979 = vunpack.c.l.s4 1983009808
        %v980 = vunpack.c.0.s8 %v979
        %v981 = vlaneseq
        %v982 = vshrl.u32 %v981, 7
        %v983 = vsub.s32 %v980, %v982
        %v984 = vrot.slane %v976, %v983
        %v986 = vunpack.c.l.s4 1983009808
        %v987 = vunpack.c.0.s8 %v986
        %v988 = vlaneseq
        %v989 = vshrl.u32 %v988, 7
        %v990 = vsub.s32 %v987, %v989
        %v991 = vrot.slane %v977, %v990
        %v992 = vcombine.low %v893, %v905
        %v993 = vcombine.high %v893, %v905
        %v995 = vunpack.c.l.s4 1983009808
        %v996 = vunpack.c.0.s8 %v995
        %v997 = vlaneseq
        %v998 = vshrl.u32 %v997, 7
        %v999 = vsub.s32 %v996, %v998
        %v1000 = vrot.slane %v992, %v999
        %v1002 = vunpack.c.l.s4 1983009808
        %v1003 = vunpack.c.0.s8 %v1002
        %v1004 = vlaneseq
        %v1005 = vshrl.u32 %v1004, 7
        %v1006 = vsub.s32 %v1003, %v1005
        %v1007 = vrot.slane %v993, %v1006
        %v1008 = vcombine.low %v984, %v1000
        %v1009 = vcombine.high %v984, %v1000
        %v1011 = vunpack.c.l.s4 1934713408
        %v1012 = vunpack.c.0.s8 %v1011
        %v1013 = vlaneseq
        %v1014 = vshrl.u32 %v1013, 7
        %v1015 = vsub.s32 %v1012, %v1014
        %v1016 = vrot.slane %v1008, %v1015
        %v1018 = vunpack.c.l.s4 1934713408
        %v1019 = vunpack.c.0.s8 %v1018
        %v1020 = vlaneseq
        %v1021 = vshrl.u32 %v1020, 7
        %v1022 = vsub.s32 %v1019, %v1021
        %v1023 = vrot.slane %v1009, %v1022
        %v1024 = vcombine.low %v991, %v1007
        %v1025 = vcombine.high %v991, %v1007
        %v1027 = vunpack.c.l.s4 1934713408
        %v1028 = vunpack.c.0.s8 %v1027
        %v1029 = vlaneseq
        %v1030 = vshrl.u32 %v1029, 7
        %v1031 = vsub.s32 %v1028, %v1030
        %v1032 = vrot.slane %v1024, %v1031
        %v1034 = vunpack.c.l.s4 1934713408
        %v1035 = vunpack.c.0.s8 %v1034
        %v1036 = vlaneseq
        %v1037 = vshrl.u32 %v1036, 7
        %v1038 = vsub.s32 %v1035, %v1037
        %v1039 = vrot.slane %v1025, %v1038
        %v1040 = vcombine.high %v1016, 0.0
        %v1041 = vcombine.high %v1023, 0.0
        %v1042 = vcombine.high %v1032, 0.0
        %v1043 = vcombine.high %v1039, 0.0
        %v1044 = vcombine.low %v948, %v955
        %v1046 = vunpack.c.l.s4 1983009808
        %v1047 = vunpack.c.0.s8 %v1046
        %v1048 = vlaneseq
        %v1049 = vshrl.u32 %v1048, 7
        %v1050 = vsub.s32 %v1047, %v1049
        %v1051 = vrot.slane %v1044, %v1050
        %v1052 = vcombine.low %v972, %v973
        %v1054 = vunpack.c.l.s4 1983009808
        %v1055 = vunpack.c.0.s8 %v1054
        %v1056 = vlaneseq
        %v1057 = vshrl.u32 %v1056, 7
        %v1058 = vsub.s32 %v1055, %v1057
        %v1059 = vrot.slane %v1052, %v1058
        %v1060 = vcombine.low %v964, %v971
        %v1062 = vunpack.c.l.s4 1983009808
        %v1063 = vunpack.c.0.s8 %v1062
        %v1064 = vlaneseq
        %v1065 = vshrl.u32 %v1064, 7
        %v1066 = vsub.s32 %v1063, %v1065
        %v1067 = vrot.slane %v1060, %v1066
        %v1068 = vcombine.low %v974, %v975
        %v1070 = vunpack.c.l.s4 1983009808
        %v1071 = vunpack.c.0.s8 %v1070
        %v1072 = vlaneseq
        %v1073 = vshrl.u32 %v1072, 7
        %v1074 = vsub.s32 %v1071, %v1073
        %v1075 = vrot.slane %v1068, %v1074
        %v1076 = vcombine.low %v1051, %v1059
        %v1077 = vcombine.high %v1051, %v1059
        %v1079 = vunpack.c.l.s4 1934713408
        %v1080 = vunpack.c.0.s8 %v1079
        %v1081 = vlaneseq
        %v1082 = vshrl.u32 %v1081, 7
        %v1083 = vsub.s32 %v1080, %v1082
        %v1084 = vrot.slane %v1076, %v1083
        %v1086 = vunpack.c.l.s4 1934713408
        %v1087 = vunpack.c.0.s8 %v1086
        %v1088 = vlaneseq
        %v1089 = vshrl.u32 %v1088, 7
        %v1090 = vsub.s32 %v1087, %v1089
        %v1091 = vrot.slane %v1077, %v1090
        %v1092 = vcombine.low %v1067, %v1075
        %v1093 = vcombine.high %v1067, %v1075
        %v1095 = vunpack.c.l.s4 1934713408
        %v1096 = vunpack.c.0.s8 %v1095
        %v1097 = vlaneseq
        %v1098 = vshrl.u32 %v1097, 7
        %v1099 = vsub.s32 %v1096, %v1098
        %v1100 = vrot.slane %v1092, %v1099
        %v1102 = vunpack.c.l.s4 1934713408
        %v1103 = vunpack.c.0.s8 %v1102
        %v1104 = vlaneseq
        %v1105 = vshrl.u32 %v1104, 7
        %v1106 = vsub.s32 %v1103, %v1105
        %v1107 = vrot.slane %v1093, %v1106
        %v1108 = vcombine.low %v1084, %v1100
        %v1109 = vcombine.high %v1084, %v1100
        %v1110 = vcombine.low %v1091, %v1107
        %v1111 = vcombine.high %v1091, %v1107
        %v1112 = vcombine.low %v1016, %v1023
        %v1114 = vunpack.c.l.s4 1983009808
        %v1115 = vunpack.c.0.s8 %v1114
        %v1116 = vlaneseq
        %v1117 = vshrl.u32 %v1116, 7
        %v1118 = vsub.s32 %v1115, %v1117
        %v1119 = vrot.slane %v1112, %v1118
        %v1120 = vcombine.low %v1040, %v1041
        %v1122 = vunpack.c.l.s4 1983009808
        %v1123 = vunpack.c.0.s8 %v1122
        %v1124 = vlaneseq
        %v1125 = vshrl.u32 %v1124, 7
        %v1126 = vsub.s32 %v1123, %v1125
        %v1127 = vrot.slane %v1120, %v1126
        %v1128 = vcombine.low %v1032, %v1039
        %v1130 = vunpack.c.l.s4 1983009808
        %v1131 = vunpack.c.0.s8 %v1130
        %v1132 = vlaneseq
        %v1133 = vshrl.u32 %v1132, 7
        %v1134 = vsub.s32 %v1131, %v1133
        %v1135 = vrot.slane %v1128, %v1134
        %v1136 = vcombine.low %v1042, %v1043
        %v1138 = vunpack.c.l.s4 1983009808
        %v1139 = vunpack.c.0.s8 %v1138
        %v1140 = vlaneseq
        %v1141 = vshrl.u32 %v1140, 7
        %v1142 = vsub.s32 %v1139, %v1141
        %v1143 = vrot.slane %v1136, %v1142
        %v1144 = vcombine.low %v1119, %v1127
        %v1145 = vcombine.high %v1119, %v1127
        %v1147 = vunpack.c.l.s4 1934713408
        %v1148 = vunpack.c.0.s8 %v1147
        %v1149 = vlaneseq
        %v1150 = vshrl.u32 %v1149, 7
        %v1151 = vsub.s32 %v1148, %v1150
        %v1152 = vrot.slane %v1144, %v1151
        %v1154 = vunpack.c.l.s4 1934713408
        %v1155 = vunpack.c.0.s8 %v1154
        %v1156 = vlaneseq
        %v1157 = vshrl.u32 %v1156, 7
        %v1158 = vsub.s32 %v1155, %v1157
        %v1159 = vrot.slane %v1145, %v1158
        %v1160 = vcombine.low %v1135, %v1143
        %v1161 = vcombine.high %v1135, %v1143
        %v1163 = vunpack.c.l.s4 1934713408
        %v1164 = vunpack.c.0.s8 %v1163
        %v1165 = vlaneseq
        %v1166 = vshrl.u32 %v1165, 7
        %v1167 = vsub.s32 %v1164, %v1166
        %v1168 = vrot.slane %v1160, %v1167
        %v1170 = vunpack.c.l.s4 1934713408
        %v1171 = vunpack.c.0.s8 %v1170
        %v1172 = vlaneseq
        %v1173 = vshrl.u32 %v1172, 7
        %v1174 = vsub.s32 %v1171, %v1173
        %v1175 = vrot.slane %v1161, %v1174
        %v1176 = vcombine.low %v1152, %v1168
        %v1177 = vcombine.high %v1152, %v1168
        %v1178 = vcombine.low %v1159, %v1175
        %v1179 = vcombine.high %v1159, %v1175
        %v1180 = vpack.c.bf16 %v1176, %v1108
        %v1181 = vpack.c.bf16 %v1177, %v1109
        %v1182 = vpack.c.bf16 %v1178, %v1110
        %v1183 = vpack.c.bf16 %v1179, %v1111
        %v1188 = vunpack.c.l.b16 %v1180
        %v1189 = vunpack.c.h.b16 %v1180
        %v1190 = vunpack.c.l.b16 %v1181
        %v1191 = vunpack.c.h.b16 %v1181
        %v1192 = vunpack.c.l.b16 %v1182
        %v1193 = vunpack.c.h.b16 %v1182
        %v1194 = vunpack.c.l.b16 %v1183
        %v1195 = vunpack.c.h.b16 %v1183
        %v1196 = vpack.c.b16 %v1188, %v1188
        %v1197 = vpack.c.b16 %v1189, %v1189
        %v1198 = vpack.c.b16 %v1190, %v1190
        %v1199 = vpack.c.b16 %v1191, %v1191
        %v1200 = vpack.c.b16 %v1192, %v1192
        %v1201 = vpack.c.b16 %v1193, %v1193
        %v1202 = vpack.c.b16 %v1194, %v1194
        %v1203 = vpack.c.b16 %v1195, %v1195
        %1212 = vst.msk [vmem:[%s404] sm:$0xf] %vm815, %v1196
        %1213 = vst.msk [vmem:[%s404 + $0x4] sm:$0xf] %vm815, %v1197
        %1214 = vst.msk [vmem:[%s404 + $0x8] sm:$0xf] %vm815, %v1198
        %1215 = vst.msk [vmem:[%s404 + $0xc] sm:$0xf] %vm815, %v1199
        %1216 = vst.msk [vmem:[%s404 + $0x10] sm:$0xf] %vm815, %v1200
        %1217 = vst.msk [vmem:[%s404 + $0x14] sm:$0xf] %vm815, %v1201
        %1218 = vst.msk [vmem:[%s404 + $0x18] sm:$0xf] %vm815, %v1202
        %1219 = vst.msk [vmem:[%s404 + $0x1c] sm:$0xf] %vm815, %v1203
        %v1220 = vld [vmem:[%s5] sm:$0xf]
        %v1221 = vld [vmem:[%s5 + $0x4] sm:$0xf]
        %v1222 = vld [vmem:[%s5 + $0x8] sm:$0xf]
        %v1223 = vld [vmem:[%s5 + $0xc] sm:$0xf]
        %v1224 = vld [vmem:[%s6] sm:$0x1]
        %v1226 = vlaneseq
        %v1227 = vshrl.u32 %v1226, 7
        %v1228 = vsub.s32 0, %v1227
        %v1229 = vrot.slane %v1224, %v1228
        %v1235 = vunpack.c.l.b16 %v1220
        %v1236 = vunpack.c.l.b16 %v1221
        %v1237 = vunpack.c.l.b16 %v1222
        %v1238 = vunpack.c.l.b16 %v1223
        %v1239 = vpack.c.b16 %v1236, %v1235
        %v1240 = vpack.c.b16 %v1238, %v1237
        %1243 = vmatprep.subr.bf16.mxu0 0
        %1244 = vmatpush1.bf16.msra.mxu0 %v1239
        %1245 = vmatprep.subr.bf16.mxu0 0
        %1246 = vmatpush1.bf16.msra.mxu0 %v1240
        %1247 = vmatprep.subr.bf16.mxu0 0
        %1248 = vmatpush1.bf16.msra.mxu0 0
        %1249 = vmatprep.subr.bf16.mxu0 0
        %1250 = vmatpush1.bf16.msra.mxu0 0
        %1251 = vmatprep.subr.bf16.mxu0 0
        %1252 = vmatpush1.bf16.msra.mxu0 0
        %1253 = vmatprep.subr.bf16.mxu0 0
        %1254 = vmatpush1.bf16.msra.mxu0 0
        %1255 = vmatprep.subr.bf16.mxu0 0
        %1256 = vmatpush1.bf16.msra.mxu0 0
        %1257 = vmatprep.subr.bf16.mxu0 0
        %1258 = vmatpush1.bf16.msra.mxu0 0
        %1259 = vmatprep.subr.bf16.mxu0 0
        %1260 = vmatpush1.bf16.msra.mxu0 0
        %1261 = vmatprep.subr.bf16.mxu0 0
        %1262 = vmatpush1.bf16.msra.mxu0 0
        %1263 = vmatprep.subr.bf16.mxu0 0
        %1264 = vmatpush1.bf16.msra.mxu0 0
        %1265 = vmatprep.subr.bf16.mxu0 0
        %1266 = vmatpush1.bf16.msra.mxu0 0
        %1267 = vmatprep.subr.bf16.mxu0 0
        %1268 = vmatpush1.bf16.msra.mxu0 0
        %1269 = vmatprep.subr.bf16.mxu0 0
        %1270 = vmatpush1.bf16.msra.mxu0 0
        %1271 = vmatprep.subr.bf16.mxu0 0
        %1272 = vmatpush1.bf16.msra.mxu0 0
        %1273 = vmatprep.subr.bf16.mxu0 0
        %1274 = vmatpush1.bf16.msra.mxu0 0
        %1275 = vmatprep.mubr.bf16.mxu0 0
        %1276 = vmatmul.mubr.bf16.gmra.mrb[0].mxu0 %v448
        %v1277 = vpop.f32.mrb[0].mxu0
        %v1278 = vadd.f32 %v1229, %v1277
        %v1279 = vpop.f32.mrb[0].mxu0
        %v1280 = vpop.f32.mrb[0].mxu0
        %v1281 = vadd.f32 %v1229, %v1280
        %v1282 = vpop.f32.mrb[0].mxu0
        %1283 = vdwg.mxu0
        %1286 = vrot.lane.b32.xlu0 %v1278, 120
        %v1287 = vpop.permute.xlu0 %1286
        %1288 = vrot.lane.b32.xlu0 %v1281, 120
        %v1289 = vpop.permute.xlu0 %1288
        %1292 = vrot.lane.b32.xlu0 %v1278, 112
        %v1293 = vpop.permute.xlu0 %1292
        %1294 = vrot.lane.b32.xlu0 %v1281, 112
        %v1295 = vpop.permute.xlu0 %1294
        %1298 = vrot.lane.b32.xlu0 %v1278, 104
        %v1299 = vpop.permute.xlu0 %1298
        %1300 = vrot.lane.b32.xlu0 %v1281, 104
        %v1301 = vpop.permute.xlu0 %1300
        %v1304 = vcombine.low %v1278, %v1293
        %v1305 = vcombine.high %v1278, %v1293
        %v1307 = vunpack.c.l.s4 1983009808
        %v1308 = vunpack.c.0.s8 %v1307
        %v1309 = vlaneseq
        %v1310 = vshrl.u32 %v1309, 7
        %v1311 = vsub.s32 %v1308, %v1310
        %v1312 = vrot.slane %v1304, %v1311
        %v1314 = vunpack.c.l.s4 1983009808
        %v1315 = vunpack.c.0.s8 %v1314
        %v1316 = vlaneseq
        %v1317 = vshrl.u32 %v1316, 7
        %v1318 = vsub.s32 %v1315, %v1317
        %v1319 = vrot.slane %v1305, %v1318
        %v1320 = vcombine.low %v1287, %v1299
        %v1321 = vcombine.high %v1287, %v1299
        %v1323 = vunpack.c.l.s4 1983009808
        %v1324 = vunpack.c.0.s8 %v1323
        %v1325 = vlaneseq
        %v1326 = vshrl.u32 %v1325, 7
        %v1327 = vsub.s32 %v1324, %v1326
        %v1328 = vrot.slane %v1320, %v1327
        %v1330 = vunpack.c.l.s4 1983009808
        %v1331 = vunpack.c.0.s8 %v1330
        %v1332 = vlaneseq
        %v1333 = vshrl.u32 %v1332, 7
        %v1334 = vsub.s32 %v1331, %v1333
        %v1335 = vrot.slane %v1321, %v1334
        %v1336 = vcombine.low %v1312, %v1328
        %v1337 = vcombine.high %v1312, %v1328
        %v1339 = vunpack.c.l.s4 1934713408
        %v1340 = vunpack.c.0.s8 %v1339
        %v1341 = vlaneseq
        %v1342 = vshrl.u32 %v1341, 7
        %v1343 = vsub.s32 %v1340, %v1342
        %v1344 = vrot.slane %v1336, %v1343
        %v1346 = vunpack.c.l.s4 1934713408
        %v1347 = vunpack.c.0.s8 %v1346
        %v1348 = vlaneseq
        %v1349 = vshrl.u32 %v1348, 7
        %v1350 = vsub.s32 %v1347, %v1349
        %v1351 = vrot.slane %v1337, %v1350
        %v1352 = vcombine.low %v1319, %v1335
        %v1353 = vcombine.high %v1319, %v1335
        %v1355 = vunpack.c.l.s4 1934713408
        %v1356 = vunpack.c.0.s8 %v1355
        %v1357 = vlaneseq
        %v1358 = vshrl.u32 %v1357, 7
        %v1359 = vsub.s32 %v1356, %v1358
        %v1360 = vrot.slane %v1352, %v1359
        %v1362 = vunpack.c.l.s4 1934713408
        %v1363 = vunpack.c.0.s8 %v1362
        %v1364 = vlaneseq
        %v1365 = vshrl.u32 %v1364, 7
        %v1366 = vsub.s32 %v1363, %v1365
        %v1367 = vrot.slane %v1353, %v1366
        %v1368 = vcombine.high %v1344, 0.0
        %v1369 = vcombine.high %v1351, 0.0
        %v1370 = vcombine.high %v1360, 0.0
        %v1371 = vcombine.high %v1367, 0.0
        %v1372 = vcombine.low %v1281, %v1295
        %v1373 = vcombine.high %v1281, %v1295
        %v1375 = vunpack.c.l.s4 1983009808
        %v1376 = vunpack.c.0.s8 %v1375
        %v1377 = vlaneseq
        %v1378 = vshrl.u32 %v1377, 7
        %v1379 = vsub.s32 %v1376, %v1378
        %v1380 = vrot.slane %v1372, %v1379
        %v1382 = vunpack.c.l.s4 1983009808
        %v1383 = vunpack.c.0.s8 %v1382
        %v1384 = vlaneseq
        %v1385 = vshrl.u32 %v1384, 7
        %v1386 = vsub.s32 %v1383, %v1385
        %v1387 = vrot.slane %v1373, %v1386
        %v1388 = vcombine.low %v1289, %v1301
        %v1389 = vcombine.high %v1289, %v1301
        %v1391 = vunpack.c.l.s4 1983009808
        %v1392 = vunpack.c.0.s8 %v1391
        %v1393 = vlaneseq
        %v1394 = vshrl.u32 %v1393, 7
        %v1395 = vsub.s32 %v1392, %v1394
        %v1396 = vrot.slane %v1388, %v1395
        %v1398 = vunpack.c.l.s4 1983009808
        %v1399 = vunpack.c.0.s8 %v1398
        %v1400 = vlaneseq
        %v1401 = vshrl.u32 %v1400, 7
        %v1402 = vsub.s32 %v1399, %v1401
        %v1403 = vrot.slane %v1389, %v1402
        %v1404 = vcombine.low %v1380, %v1396
        %v1405 = vcombine.high %v1380, %v1396
        %v1407 = vunpack.c.l.s4 1934713408
        %v1408 = vunpack.c.0.s8 %v1407
        %v1409 = vlaneseq
        %v1410 = vshrl.u32 %v1409, 7
        %v1411 = vsub.s32 %v1408, %v1410
        %v1412 = vrot.slane %v1404, %v1411
        %v1414 = vunpack.c.l.s4 1934713408
        %v1415 = vunpack.c.0.s8 %v1414
        %v1416 = vlaneseq
        %v1417 = vshrl.u32 %v1416, 7
        %v1418 = vsub.s32 %v1415, %v1417
        %v1419 = vrot.slane %v1405, %v1418
        %v1420 = vcombine.low %v1387, %v1403
        %v1421 = vcombine.high %v1387, %v1403
        %v1423 = vunpack.c.l.s4 1934713408
        %v1424 = vunpack.c.0.s8 %v1423
        %v1425 = vlaneseq
        %v1426 = vshrl.u32 %v1425, 7
        %v1427 = vsub.s32 %v1424, %v1426
        %v1428 = vrot.slane %v1420, %v1427
        %v1430 = vunpack.c.l.s4 1934713408
        %v1431 = vunpack.c.0.s8 %v1430
        %v1432 = vlaneseq
        %v1433 = vshrl.u32 %v1432, 7
        %v1434 = vsub.s32 %v1431, %v1433
        %v1435 = vrot.slane %v1421, %v1434
        %v1436 = vcombine.high %v1412, 0.0
        %v1437 = vcombine.high %v1419, 0.0
        %v1438 = vcombine.high %v1428, 0.0
        %v1439 = vcombine.high %v1435, 0.0
        %v1440 = vcombine.low %v1344, %v1351
        %v1442 = vunpack.c.l.s4 1983009808
        %v1443 = vunpack.c.0.s8 %v1442
        %v1444 = vlaneseq
        %v1445 = vshrl.u32 %v1444, 7
        %v1446 = vsub.s32 %v1443, %v1445
        %v1447 = vrot.slane %v1440, %v1446
        %v1448 = vcombine.low %v1368, %v1369
        %v1450 = vunpack.c.l.s4 1983009808
        %v1451 = vunpack.c.0.s8 %v1450
        %v1452 = vlaneseq
        %v1453 = vshrl.u32 %v1452, 7
        %v1454 = vsub.s32 %v1451, %v1453
        %v1455 = vrot.slane %v1448, %v1454
        %v1456 = vcombine.low %v1360, %v1367
        %v1458 = vunpack.c.l.s4 1983009808
        %v1459 = vunpack.c.0.s8 %v1458
        %v1460 = vlaneseq
        %v1461 = vshrl.u32 %v1460, 7
        %v1462 = vsub.s32 %v1459, %v1461
        %v1463 = vrot.slane %v1456, %v1462
        %v1464 = vcombine.low %v1370, %v1371
        %v1466 = vunpack.c.l.s4 1983009808
        %v1467 = vunpack.c.0.s8 %v1466
        %v1468 = vlaneseq
        %v1469 = vshrl.u32 %v1468, 7
        %v1470 = vsub.s32 %v1467, %v1469
        %v1471 = vrot.slane %v1464, %v1470
        %v1472 = vcombine.low %v1447, %v1455
        %v1473 = vcombine.high %v1447, %v1455
        %v1475 = vunpack.c.l.s4 1934713408
        %v1476 = vunpack.c.0.s8 %v1475
        %v1477 = vlaneseq
        %v1478 = vshrl.u32 %v1477, 7
        %v1479 = vsub.s32 %v1476, %v1478
        %v1480 = vrot.slane %v1472, %v1479
        %v1482 = vunpack.c.l.s4 1934713408
        %v1483 = vunpack.c.0.s8 %v1482
        %v1484 = vlaneseq
        %v1485 = vshrl.u32 %v1484, 7
        %v1486 = vsub.s32 %v1483, %v1485
        %v1487 = vrot.slane %v1473, %v1486
        %v1488 = vcombine.low %v1463, %v1471
        %v1489 = vcombine.high %v1463, %v1471
        %v1491 = vunpack.c.l.s4 1934713408
        %v1492 = vunpack.c.0.s8 %v1491
        %v1493 = vlaneseq
        %v1494 = vshrl.u32 %v1493, 7
        %v1495 = vsub.s32 %v1492, %v1494
        %v1496 = vrot.slane %v1488, %v1495
        %v1498 = vunpack.c.l.s4 1934713408
        %v1499 = vunpack.c.0.s8 %v1498
        %v1500 = vlaneseq
        %v1501 = vshrl.u32 %v1500, 7
        %v1502 = vsub.s32 %v1499, %v1501
        %v1503 = vrot.slane %v1489, %v1502
        %v1504 = vcombine.low %v1480, %v1496
        %v1505 = vcombine.high %v1480, %v1496
        %v1506 = vcombine.low %v1487, %v1503
        %v1507 = vcombine.high %v1487, %v1503
        %v1508 = vcombine.low %v1412, %v1419
        %v1510 = vunpack.c.l.s4 1983009808
        %v1511 = vunpack.c.0.s8 %v1510
        %v1512 = vlaneseq
        %v1513 = vshrl.u32 %v1512, 7
        %v1514 = vsub.s32 %v1511, %v1513
        %v1515 = vrot.slane %v1508, %v1514
        %v1516 = vcombine.low %v1436, %v1437
        %v1518 = vunpack.c.l.s4 1983009808
        %v1519 = vunpack.c.0.s8 %v1518
        %v1520 = vlaneseq
        %v1521 = vshrl.u32 %v1520, 7
        %v1522 = vsub.s32 %v1519, %v1521
        %v1523 = vrot.slane %v1516, %v1522
        %v1524 = vcombine.low %v1428, %v1435
        %v1526 = vunpack.c.l.s4 1983009808
        %v1527 = vunpack.c.0.s8 %v1526
        %v1528 = vlaneseq
        %v1529 = vshrl.u32 %v1528, 7
        %v1530 = vsub.s32 %v1527, %v1529
        %v1531 = vrot.slane %v1524, %v1530
        %v1532 = vcombine.low %v1438, %v1439
        %v1534 = vunpack.c.l.s4 1983009808
        %v1535 = vunpack.c.0.s8 %v1534
        %v1536 = vlaneseq
        %v1537 = vshrl.u32 %v1536, 7
        %v1538 = vsub.s32 %v1535, %v1537
        %v1539 = vrot.slane %v1532, %v1538
        %v1540 = vcombine.low %v1515, %v1523
        %v1541 = vcombine.high %v1515, %v1523
        %v1543 = vunpack.c.l.s4 1934713408
        %v1544 = vunpack.c.0.s8 %v1543
        %v1545 = vlaneseq
        %v1546 = vshrl.u32 %v1545, 7
        %v1547 = vsub.s32 %v1544, %v1546
        %v1548 = vrot.slane %v1540, %v1547
        %v1550 = vunpack.c.l.s4 1934713408
        %v1551 = vunpack.c.0.s8 %v1550
        %v1552 = vlaneseq
        %v1553 = vshrl.u32 %v1552, 7
        %v1554 = vsub.s32 %v1551, %v1553
        %v1555 = vrot.slane %v1541, %v1554
        %v1556 = vcombine.low %v1531, %v1539
        %v1557 = vcombine.high %v1531, %v1539
        %v1559 = vunpack.c.l.s4 1934713408
        %v1560 = vunpack.c.0.s8 %v1559
        %v1561 = vlaneseq
        %v1562 = vshrl.u32 %v1561, 7
        %v1563 = vsub.s32 %v1560, %v1562
        %v1564 = vrot.slane %v1556, %v1563
        %v1566 = vunpack.c.l.s4 1934713408
        %v1567 = vunpack.c.0.s8 %v1566
        %v1568 = vlaneseq
        %v1569 = vshrl.u32 %v1568, 7
        %v1570 = vsub.s32 %v1567, %v1569
        %v1571 = vrot.slane %v1557, %v1570
        %v1572 = vcombine.low %v1548, %v1564
        %v1573 = vcombine.high %v1548, %v1564
        %v1574 = vcombine.low %v1555, %v1571
        %v1575 = vcombine.high %v1555, %v1571
        %v1576 = vpack.c.bf16 %v1572, %v1504
        %v1577 = vpack.c.bf16 %v1573, %v1505
        %v1578 = vpack.c.bf16 %v1574, %v1506
        %v1579 = vpack.c.bf16 %v1575, %v1507
        %v1584 = vunpack.c.l.b16 %v1576
        %v1585 = vunpack.c.h.b16 %v1576
        %v1586 = vunpack.c.l.b16 %v1577
        %v1587 = vunpack.c.h.b16 %v1577
        %v1588 = vunpack.c.l.b16 %v1578
        %v1589 = vunpack.c.h.b16 %v1578
        %v1590 = vunpack.c.l.b16 %v1579
        %v1591 = vunpack.c.h.b16 %v1579
        %v1592 = vpack.c.b16 %v1584, %v1584
        %v1593 = vpack.c.b16 %v1585, %v1585
        %v1594 = vpack.c.b16 %v1586, %v1586
        %v1595 = vpack.c.b16 %v1587, %v1587
        %v1596 = vpack.c.b16 %v1588, %v1588
        %v1597 = vpack.c.b16 %v1589, %v1589
        %v1598 = vpack.c.b16 %v1590, %v1590
        %v1599 = vpack.c.b16 %v1591, %v1591
        %1608 = vst.msk [vmem:[%s410] sm:$0xf] %vm815, %v1592
        %1609 = vst.msk [vmem:[%s410 + $0x4] sm:$0xf] %vm815, %v1593
        %1610 = vst.msk [vmem:[%s410 + $0x8] sm:$0xf] %vm815, %v1594
        %1611 = vst.msk [vmem:[%s410 + $0xc] sm:$0xf] %vm815, %v1595
        %1612 = vst.msk [vmem:[%s410 + $0x10] sm:$0xf] %vm815, %v1596
        %1613 = vst.msk [vmem:[%s410 + $0x14] sm:$0xf] %vm815, %v1597
        %1614 = vst.msk [vmem:[%s410 + $0x18] sm:$0xf] %vm815, %v1598
        %1615 = vst.msk [vmem:[%s410 + $0x1c] sm:$0xf] %vm815, %v1599
        %s1616 = sand.u32 %s201, 1
        %s1617 = sand.u32 %s201, 1
        %s1618 = smul.addr %s1617, 32
        %s1619 = scalar_lea.vmem [#allocation7], %s1618
        %s1620 = sand.u32 %s229, 1
        %s1621 = sand.u32 %s229, 1
        %s1622 = smul.addr %s1621, 32
        %s1623 = scalar_lea.vmem [#allocation8], %s1622
        %s1624 = sand.u32 %s257, 1
        %s1625 = sand.u32 %s257, 1
        %s1626 = smul.addr %s1625, 32
        %s1627 = scalar_lea.vmem [#allocation9], %s1626
        // Predicated region
        $region61: #{tpu_custom_call.1} parent=47 // pred_check
          %p1628 = pneg %p211
        $region62: #{tpu_custom_call.1} parent=47 // pred_check_branch
          %1630 = sbr.rel (%p1628) target = $region64
        $region63: #{tpu_custom_call.1} parent=47 // pred_region
          %s1631 = smul.u32 2, %s30
          %s1632 = smul.addr %s29, 16
          %s1633 = sadd.s32 %s1631, %s1632
          %s1634 = smul.addr %s1633, 4
          %s1635 = scalar_lea.vmem %s7, %s1634
          // Predicated region
          $region65: #{tpu_custom_call.1} parent=63 // pred_check
            _
          $region66: #{tpu_custom_call.1} parent=63 // pred_check_branch
            %1637 = sbr.rel (0) target = $region68
          $region67: #{tpu_custom_call.1} parent=63 // pred_region
            // Predicated region
            $region69: #{tpu_custom_call.1} parent=67 // pred_check
              _
            $region70: #{tpu_custom_call.1} parent=67 // pred_check_branch
              %1639 = sbr.rel target = $region72
            $region71: #{tpu_custom_call.1} parent=67 // pred_region
              // Predicated region
              $region84: #{tpu_custom_call.1} parent=71 // pred_check
                _
              $region85: #{tpu_custom_call.1} parent=71 // pred_check_branch
                %1668 = sbr.rel (0) target = $region87
              $region86: #{tpu_custom_call.1} parent=71 // pred_region
                loop: start=0, step=1, limit=1
                $region88: #{tpu_custom_call.1} parent=86 // loop_pre_header
                  _
                $region89: #{tpu_custom_call.1} parent=86 // loop_header
                  %s1670 = sphi 0, %s1674
                  %p1671 = scmp.ge.s32.totalorder %s1670, 1
                  %s1675 = sphi %s1619, %s1619
                  %s1676 = sphi %s1635, %s1635
                $region90: #{tpu_custom_call.1} parent=86 // loop_header_branch
                  %1673 = sbr.rel (%p1671) target = $region94
                $region91: #{tpu_custom_call.1} parent=86 // loop_body
                  _
                $region92: #{tpu_custom_call.1} parent=86 // loop_footer
                  %s1674 = sadd.s32 1, %s1670
                $region93: #{tpu_custom_call.1} parent=86 // loop_footer_branch
                  %1669 = sbr.rel target = $region89
                $region94: #{tpu_custom_call.1} parent=86 // loop_exit
                  _
                loop: start=0, step=1, limit=1
                $region95: #{tpu_custom_call.1} parent=86 // loop_pre_header
                  _
                $region96: #{tpu_custom_call.1} parent=86 // loop_header
                  %s1679 = sphi 0, %s1683
                  %p1680 = scmp.ge.s32.totalorder %s1679, 1
                  %s1684 = sphi %s1619, %s1619
                  %s1685 = sphi %s1635, %s1635
                $region97: #{tpu_custom_call.1} parent=86 // loop_header_branch
                  %1682 = sbr.rel (%p1680) target = $region101
                $region98: #{tpu_custom_call.1} parent=86 // loop_body
                  %v1686 = vld [vmem:[%s1684] sm:$0xf]
                  %1687 = vst [vmem:[%s1685] sm:$0xf] %v1686
                  %v1688 = vld [vmem:[%s1684 + $0x4] sm:$0xf]
                  %1689 = vst [vmem:[%s1685 + $0x4] sm:$0xf] %v1688
                  %v1690 = vld [vmem:[%s1684 + $0x8] sm:$0xf]
                  %1691 = vst [vmem:[%s1685 + $0x10] sm:$0xf] %v1690
                  %v1692 = vld [vmem:[%s1684 + $0xc] sm:$0xf]
                  %1693 = vst [vmem:[%s1685 + $0x14] sm:$0xf] %v1692
                  %v1694 = vld [vmem:[%s1684 + $0x10] sm:$0xf]
                  %1695 = vst [vmem:[%s1685 + $0x20] sm:$0xf] %v1694
                  %v1696 = vld [vmem:[%s1684 + $0x14] sm:$0xf]
                  %1697 = vst [vmem:[%s1685 + $0x24] sm:$0xf] %v1696
                  %v1698 = vld [vmem:[%s1684 + $0x18] sm:$0xf]
                  %1699 = vst [vmem:[%s1685 + $0x30] sm:$0xf] %v1698
                  %v1700 = vld [vmem:[%s1684 + $0x1c] sm:$0xf]
                  %1701 = vst [vmem:[%s1685 + $0x34] sm:$0xf] %v1700
                $region99: #{tpu_custom_call.1} parent=86 // loop_footer
                  %s1683 = sadd.s32 1, %s1679
                $region100: #{tpu_custom_call.1} parent=86 // loop_footer_branch
                  %1678 = sbr.rel target = $region96
                $region101: #{tpu_custom_call.1} parent=86 // loop_exit
                  _
              $region87: #{tpu_custom_call.1} parent=71 // pred_fallthru
                _
            $region72: #{tpu_custom_call.1} parent=67 // pred_fallthru
              _
            // Predicated region
            $region73: #{tpu_custom_call.1} parent=67 // pred_check
              _
            $region74: #{tpu_custom_call.1} parent=67 // pred_check_branch
              %1641 = sbr.rel (0) target = $region76
            $region75: #{tpu_custom_call.1} parent=67 // pred_region
              loop: start=0, step=1, limit=1
              $region77: #{tpu_custom_call.1} parent=75 // loop_pre_header
                _
              $region78: #{tpu_custom_call.1} parent=75 // loop_header
                %s1644 = sphi 0, %s1648
                %p1645 = scmp.ge.s32.totalorder %s1644, 1
                %s1649 = sphi %s1619, %s1619
                %s1650 = sphi %s1635, %s1635
              $region79: #{tpu_custom_call.1} parent=75 // loop_header_branch
                %1647 = sbr.rel (%p1645) target = $region83
              $region80: #{tpu_custom_call.1} parent=75 // loop_body
                %v1651 = vld [vmem:[%s1649] sm:$0xf]
                %1652 = vst [vmem:[%s1650] sm:$0xf] %v1651
                %v1653 = vld [vmem:[%s1649 + $0x4] sm:$0xf]
                %1654 = vst [vmem:[%s1650 + $0x4] sm:$0xf] %v1653
                %v1655 = vld [vmem:[%s1649 + $0x8] sm:$0xf]
                %1656 = vst [vmem:[%s1650 + $0x10] sm:$0xf] %v1655
                %v1657 = vld [vmem:[%s1649 + $0xc] sm:$0xf]
                %1658 = vst [vmem:[%s1650 + $0x14] sm:$0xf] %v1657
                %v1659 = vld [vmem:[%s1649 + $0x10] sm:$0xf]
                %1660 = vst [vmem:[%s1650 + $0x20] sm:$0xf] %v1659
                %v1661 = vld [vmem:[%s1649 + $0x14] sm:$0xf]
                %1662 = vst [vmem:[%s1650 + $0x24] sm:$0xf] %v1661
                %v1663 = vld [vmem:[%s1649 + $0x18] sm:$0xf]
                %1664 = vst [vmem:[%s1650 + $0x30] sm:$0xf] %v1663
                %v1665 = vld [vmem:[%s1649 + $0x1c] sm:$0xf]
                %1666 = vst [vmem:[%s1650 + $0x34] sm:$0xf] %v1665
              $region81: #{tpu_custom_call.1} parent=75 // loop_footer
                %s1648 = sadd.s32 1, %s1644
              $region82: #{tpu_custom_call.1} parent=75 // loop_footer_branch
                %1643 = sbr.rel target = $region78
              $region83: #{tpu_custom_call.1} parent=75 // loop_exit
                _
            $region76: #{tpu_custom_call.1} parent=67 // pred_fallthru
              _
          $region68: #{tpu_custom_call.1} parent=63 // pred_fallthru
            _
          %1702 = vnop
        $region64: #{tpu_custom_call.1} parent=47 // pred_fallthru
          _
        // Predicated region
        $region102: #{tpu_custom_call.1} parent=47 // pred_check
          %p1703 = pneg %p239
        $region103: #{tpu_custom_call.1} parent=47 // pred_check_branch
          %1705 = sbr.rel (%p1703) target = $region105
        $region104: #{tpu_custom_call.1} parent=47 // pred_region
          %s1706 = smul.u32 2, %s30
          %s1707 = smul.addr %s29, 16
          %s1708 = sadd.s32 %s1706, %s1707
          %s1709 = smul.addr %s1708, 4
          %s1710 = scalar_lea.vmem %s8, %s1709
          // Predicated region
          $region106: #{tpu_custom_call.1} parent=104 // pred_check
            _
          $region107: #{tpu_custom_call.1} parent=104 // pred_check_branch
            %1712 = sbr.rel (0) target = $region109
          $region108: #{tpu_custom_call.1} parent=104 // pred_region
            // Predicated region
            $region110: #{tpu_custom_call.1} parent=108 // pred_check
              _
            $region111: #{tpu_custom_call.1} parent=108 // pred_check_branch
              %1714 = sbr.rel target = $region113
            $region112: #{tpu_custom_call.1} parent=108 // pred_region
              // Predicated region
              $region125: #{tpu_custom_call.1} parent=112 // pred_check
                _
              $region126: #{tpu_custom_call.1} parent=112 // pred_check_branch
                %1743 = sbr.rel (0) target = $region128
              $region127: #{tpu_custom_call.1} parent=112 // pred_region
                loop: start=0, step=1, limit=1
                $region129: #{tpu_custom_call.1} parent=127 // loop_pre_header
                  _
                $region130: #{tpu_custom_call.1} parent=127 // loop_header
                  %s1745 = sphi 0, %s1749
                  %p1746 = scmp.ge.s32.totalorder %s1745, 1
                  %s1750 = sphi %s1623, %s1623
                  %s1751 = sphi %s1710, %s1710
                $region131: #{tpu_custom_call.1} parent=127 // loop_header_branch
                  %1748 = sbr.rel (%p1746) target = $region135
                $region132: #{tpu_custom_call.1} parent=127 // loop_body
                  _
                $region133: #{tpu_custom_call.1} parent=127 // loop_footer
                  %s1749 = sadd.s32 1, %s1745
                $region134: #{tpu_custom_call.1} parent=127 // loop_footer_branch
                  %1744 = sbr.rel target = $region130
                $region135: #{tpu_custom_call.1} parent=127 // loop_exit
                  _
                loop: start=0, step=1, limit=1
                $region136: #{tpu_custom_call.1} parent=127 // loop_pre_header
                  _
                $region137: #{tpu_custom_call.1} parent=127 // loop_header
                  %s1754 = sphi 0, %s1758
                  %p1755 = scmp.ge.s32.totalorder %s1754, 1
                  %s1759 = sphi %s1623, %s1623
                  %s1760 = sphi %s1710, %s1710
                $region138: #{tpu_custom_call.1} parent=127 // loop_header_branch
                  %1757 = sbr.rel (%p1755) target = $region142
                $region139: #{tpu_custom_call.1} parent=127 // loop_body
                  %v1761 = vld [vmem:[%s1759] sm:$0xf]
                  %1762 = vst [vmem:[%s1760] sm:$0xf] %v1761
                  %v1763 = vld [vmem:[%s1759 + $0x4] sm:$0xf]
                  %1764 = vst [vmem:[%s1760 + $0x4] sm:$0xf] %v1763
                  %v1765 = vld [vmem:[%s1759 + $0x8] sm:$0xf]
                  %1766 = vst [vmem:[%s1760 + $0x10] sm:$0xf] %v1765
                  %v1767 = vld [vmem:[%s1759 + $0xc] sm:$0xf]
                  %1768 = vst [vmem:[%s1760 + $0x14] sm:$0xf] %v1767
                  %v1769 = vld [vmem:[%s1759 + $0x10] sm:$0xf]
                  %1770 = vst [vmem:[%s1760 + $0x20] sm:$0xf] %v1769
                  %v1771 = vld [vmem:[%s1759 + $0x14] sm:$0xf]
                  %1772 = vst [vmem:[%s1760 + $0x24] sm:$0xf] %v1771
                  %v1773 = vld [vmem:[%s1759 + $0x18] sm:$0xf]
                  %1774 = vst [vmem:[%s1760 + $0x30] sm:$0xf] %v1773
                  %v1775 = vld [vmem:[%s1759 + $0x1c] sm:$0xf]
                  %1776 = vst [vmem:[%s1760 + $0x34] sm:$0xf] %v1775
                $region140: #{tpu_custom_call.1} parent=127 // loop_footer
                  %s1758 = sadd.s32 1, %s1754
                $region141: #{tpu_custom_call.1} parent=127 // loop_footer_branch
                  %1753 = sbr.rel target = $region137
                $region142: #{tpu_custom_call.1} parent=127 // loop_exit
                  _
              $region128: #{tpu_custom_call.1} parent=112 // pred_fallthru
                _
            $region113: #{tpu_custom_call.1} parent=108 // pred_fallthru
              _
            // Predicated region
            $region114: #{tpu_custom_call.1} parent=108 // pred_check
              _
            $region115: #{tpu_custom_call.1} parent=108 // pred_check_branch
              %1716 = sbr.rel (0) target = $region117
            $region116: #{tpu_custom_call.1} parent=108 // pred_region
              loop: start=0, step=1, limit=1
              $region118: #{tpu_custom_call.1} parent=116 // loop_pre_header
                _
              $region119: #{tpu_custom_call.1} parent=116 // loop_header
                %s1719 = sphi 0, %s1723
                %p1720 = scmp.ge.s32.totalorder %s1719, 1
                %s1724 = sphi %s1623, %s1623
                %s1725 = sphi %s1710, %s1710
              $region120: #{tpu_custom_call.1} parent=116 // loop_header_branch
                %1722 = sbr.rel (%p1720) target = $region124
              $region121: #{tpu_custom_call.1} parent=116 // loop_body
                %v1726 = vld [vmem:[%s1724] sm:$0xf]
                %1727 = vst [vmem:[%s1725] sm:$0xf] %v1726
                %v1728 = vld [vmem:[%s1724 + $0x4] sm:$0xf]
                %1729 = vst [vmem:[%s1725 + $0x4] sm:$0xf] %v1728
                %v1730 = vld [vmem:[%s1724 + $0x8] sm:$0xf]
                %1731 = vst [vmem:[%s1725 + $0x10] sm:$0xf] %v1730
                %v1732 = vld [vmem:[%s1724 + $0xc] sm:$0xf]
                %1733 = vst [vmem:[%s1725 + $0x14] sm:$0xf] %v1732
                %v1734 = vld [vmem:[%s1724 + $0x10] sm:$0xf]
                %1735 = vst [vmem:[%s1725 + $0x20] sm:$0xf] %v1734
                %v1736 = vld [vmem:[%s1724 + $0x14] sm:$0xf]
                %1737 = vst [vmem:[%s1725 + $0x24] sm:$0xf] %v1736
                %v1738 = vld [vmem:[%s1724 + $0x18] sm:$0xf]
                %1739 = vst [vmem:[%s1725 + $0x30] sm:$0xf] %v1738
                %v1740 = vld [vmem:[%s1724 + $0x1c] sm:$0xf]
                %1741 = vst [vmem:[%s1725 + $0x34] sm:$0xf] %v1740
              $region122: #{tpu_custom_call.1} parent=116 // loop_footer
                %s1723 = sadd.s32 1, %s1719
              $region123: #{tpu_custom_call.1} parent=116 // loop_footer_branch
                %1718 = sbr.rel target = $region119
              $region124: #{tpu_custom_call.1} parent=116 // loop_exit
                _
            $region117: #{tpu_custom_call.1} parent=108 // pred_fallthru
              _
          $region109: #{tpu_custom_call.1} parent=104 // pred_fallthru
            _
          %1777 = vnop
        $region105: #{tpu_custom_call.1} parent=47 // pred_fallthru
          _
        // Predicated region
        $region143: #{tpu_custom_call.1} parent=47 // pred_check
          %p1778 = pneg %p267
        $region144: #{tpu_custom_call.1} parent=47 // pred_check_branch
          %1780 = sbr.rel (%p1778) target = $region146
        $region145: #{tpu_custom_call.1} parent=47 // pred_region
          %s1781 = smul.u32 2, %s30
          %s1782 = smul.addr %s29, 16
          %s1783 = sadd.s32 %s1781, %s1782
          %s1784 = smul.addr %s1783, 4
          %s1785 = scalar_lea.vmem %s9, %s1784
          // Predicated region
          $region147: #{tpu_custom_call.1} parent=145 // pred_check
            _
          $region148: #{tpu_custom_call.1} parent=145 // pred_check_branch
            %1787 = sbr.rel (0) target = $region150
          $region149: #{tpu_custom_call.1} parent=145 // pred_region
            // Predicated region
            $region151: #{tpu_custom_call.1} parent=149 // pred_check
              _
            $region152: #{tpu_custom_call.1} parent=149 // pred_check_branch
              %1789 = sbr.rel target = $region154
            $region153: #{tpu_custom_call.1} parent=149 // pred_region
              // Predicated region
              $region166: #{tpu_custom_call.1} parent=153 // pred_check
                _
              $region167: #{tpu_custom_call.1} parent=153 // pred_check_branch
                %1818 = sbr.rel (0) target = $region169
              $region168: #{tpu_custom_call.1} parent=153 // pred_region
                loop: start=0, step=1, limit=1
                $region170: #{tpu_custom_call.1} parent=168 // loop_pre_header
                  _
                $region171: #{tpu_custom_call.1} parent=168 // loop_header
                  %s1820 = sphi 0, %s1824
                  %p1821 = scmp.ge.s32.totalorder %s1820, 1
                  %s1825 = sphi %s1627, %s1627
                  %s1826 = sphi %s1785, %s1785
                $region172: #{tpu_custom_call.1} parent=168 // loop_header_branch
                  %1823 = sbr.rel (%p1821) target = $region176
                $region173: #{tpu_custom_call.1} parent=168 // loop_body
                  _
                $region174: #{tpu_custom_call.1} parent=168 // loop_footer
                  %s1824 = sadd.s32 1, %s1820
                $region175: #{tpu_custom_call.1} parent=168 // loop_footer_branch
                  %1819 = sbr.rel target = $region171
                $region176: #{tpu_custom_call.1} parent=168 // loop_exit
                  _
                loop: start=0, step=1, limit=1
                $region177: #{tpu_custom_call.1} parent=168 // loop_pre_header
                  _
                $region178: #{tpu_custom_call.1} parent=168 // loop_header
                  %s1829 = sphi 0, %s1833
                  %p1830 = scmp.ge.s32.totalorder %s1829, 1
                  %s1834 = sphi %s1627, %s1627
                  %s1835 = sphi %s1785, %s1785
                $region179: #{tpu_custom_call.1} parent=168 // loop_header_branch
                  %1832 = sbr.rel (%p1830) target = $region183
                $region180: #{tpu_custom_call.1} parent=168 // loop_body
                  %v1836 = vld [vmem:[%s1834] sm:$0xf]
                  %1837 = vst [vmem:[%s1835] sm:$0xf] %v1836
                  %v1838 = vld [vmem:[%s1834 + $0x4] sm:$0xf]
                  %1839 = vst [vmem:[%s1835 + $0x4] sm:$0xf] %v1838
                  %v1840 = vld [vmem:[%s1834 + $0x8] sm:$0xf]
                  %1841 = vst [vmem:[%s1835 + $0x10] sm:$0xf] %v1840
                  %v1842 = vld [vmem:[%s1834 + $0xc] sm:$0xf]
                  %1843 = vst [vmem:[%s1835 + $0x14] sm:$0xf] %v1842
                  %v1844 = vld [vmem:[%s1834 + $0x10] sm:$0xf]
                  %1845 = vst [vmem:[%s1835 + $0x20] sm:$0xf] %v1844
                  %v1846 = vld [vmem:[%s1834 + $0x14] sm:$0xf]
                  %1847 = vst [vmem:[%s1835 + $0x24] sm:$0xf] %v1846
                  %v1848 = vld [vmem:[%s1834 + $0x18] sm:$0xf]
                  %1849 = vst [vmem:[%s1835 + $0x30] sm:$0xf] %v1848
                  %v1850 = vld [vmem:[%s1834 + $0x1c] sm:$0xf]
                  %1851 = vst [vmem:[%s1835 + $0x34] sm:$0xf] %v1850
                $region181: #{tpu_custom_call.1} parent=168 // loop_footer
                  %s1833 = sadd.s32 1, %s1829
                $region182: #{tpu_custom_call.1} parent=168 // loop_footer_branch
                  %1828 = sbr.rel target = $region178
                $region183: #{tpu_custom_call.1} parent=168 // loop_exit
                  _
              $region169: #{tpu_custom_call.1} parent=153 // pred_fallthru
                _
            $region154: #{tpu_custom_call.1} parent=149 // pred_fallthru
              _
            // Predicated region
            $region155: #{tpu_custom_call.1} parent=149 // pred_check
              _
            $region156: #{tpu_custom_call.1} parent=149 // pred_check_branch
              %1791 = sbr.rel (0) target = $region158
            $region157: #{tpu_custom_call.1} parent=149 // pred_region
              loop: start=0, step=1, limit=1
              $region159: #{tpu_custom_call.1} parent=157 // loop_pre_header
                _
              $region160: #{tpu_custom_call.1} parent=157 // loop_header
                %s1794 = sphi 0, %s1798
                %p1795 = scmp.ge.s32.totalorder %s1794, 1
                %s1799 = sphi %s1627, %s1627
                %s1800 = sphi %s1785, %s1785
              $region161: #{tpu_custom_call.1} parent=157 // loop_header_branch
                %1797 = sbr.rel (%p1795) target = $region165
              $region162: #{tpu_custom_call.1} parent=157 // loop_body
                %v1801 = vld [vmem:[%s1799] sm:$0xf]
                %1802 = vst [vmem:[%s1800] sm:$0xf] %v1801
                %v1803 = vld [vmem:[%s1799 + $0x4] sm:$0xf]
                %1804 = vst [vmem:[%s1800 + $0x4] sm:$0xf] %v1803
                %v1805 = vld [vmem:[%s1799 + $0x8] sm:$0xf]
                %1806 = vst [vmem:[%s1800 + $0x10] sm:$0xf] %v1805
                %v1807 = vld [vmem:[%s1799 + $0xc] sm:$0xf]
                %1808 = vst [vmem:[%s1800 + $0x14] sm:$0xf] %v1807
                %v1809 = vld [vmem:[%s1799 + $0x10] sm:$0xf]
                %1810 = vst [vmem:[%s1800 + $0x20] sm:$0xf] %v1809
                %v1811 = vld [vmem:[%s1799 + $0x14] sm:$0xf]
                %1812 = vst [vmem:[%s1800 + $0x24] sm:$0xf] %v1811
                %v1813 = vld [vmem:[%s1799 + $0x18] sm:$0xf]
                %1814 = vst [vmem:[%s1800 + $0x30] sm:$0xf] %v1813
                %v1815 = vld [vmem:[%s1799 + $0x1c] sm:$0xf]
                %1816 = vst [vmem:[%s1800 + $0x34] sm:$0xf] %v1815
              $region163: #{tpu_custom_call.1} parent=157 // loop_footer
                %s1798 = sadd.s32 1, %s1794
              $region164: #{tpu_custom_call.1} parent=157 // loop_footer_branch
                %1793 = sbr.rel target = $region160
              $region165: #{tpu_custom_call.1} parent=157 // loop_exit
                _
            $region158: #{tpu_custom_call.1} parent=149 // pred_fallthru
              _
          $region150: #{tpu_custom_call.1} parent=145 // pred_fallthru
            _
          %1852 = vnop
        $region146: #{tpu_custom_call.1} parent=47 // pred_fallthru
          _
      $region48: #{tpu_custom_call.1} parent=5 // pred_fallthru
        _
      %p1853 = scmp.le.s32.totalorder 2, %s20
      // Predicated region
      $region184: #{tpu_custom_call.1} parent=5 // pred_check
        %p1854 = pneg %p1853
      $region185: #{tpu_custom_call.1} parent=5 // pred_check_branch
        %1856 = sbr.rel (%p1854) target = $region187
      $region186: #{tpu_custom_call.1} parent=5 // pred_region
        %s1857 = ssub.s32 %s20, 2
        // Predicated region
        $region188: #{tpu_custom_call.1} parent=186 // pred_check
          %p1858 = pneg %p217
        $region189: #{tpu_custom_call.1} parent=186 // pred_check_branch
          %1860 = sbr.rel (%p1858) target = $region191
        $region190: #{tpu_custom_call.1} parent=186 // pred_region
          %s1861 = sand.u32 %s202, 1
          %s1862 = sand.u32 %s202, 1
          %s1863 = smul.addr %s1862, 32
          %s1864 = scalar_lea.vmem [#allocation7], %s1863
        $region191: #{tpu_custom_call.1} parent=186 // pred_fallthru
          _
        // Predicated region
        $region192: #{tpu_custom_call.1} parent=186 // pred_check
          %p1865 = pneg %p245
        $region193: #{tpu_custom_call.1} parent=186 // pred_check_branch
          %1867 = sbr.rel (%p1865) target = $region195
        $region194: #{tpu_custom_call.1} parent=186 // pred_region
          %s1868 = sand.u32 %s230, 1
          %s1869 = sand.u32 %s230, 1
          %s1870 = smul.addr %s1869, 32
          %s1871 = scalar_lea.vmem [#allocation8], %s1870
        $region195: #{tpu_custom_call.1} parent=186 // pred_fallthru
          _
        // Predicated region
        $region196: #{tpu_custom_call.1} parent=186 // pred_check
          %p1872 = pneg %p273
        $region197: #{tpu_custom_call.1} parent=186 // pred_check_branch
          %1874 = sbr.rel (%p1872) target = $region199
        $region198: #{tpu_custom_call.1} parent=186 // pred_region
          %s1875 = sand.u32 %s258, 1
          %s1876 = sand.u32 %s258, 1
          %s1877 = smul.addr %s1876, 32
          %s1878 = scalar_lea.vmem [#allocation9], %s1877
        $region199: #{tpu_custom_call.1} parent=186 // pred_fallthru
          _
      $region187: #{tpu_custom_call.1} parent=5 // pred_fallthru
        _
    $region6: #{tpu_custom_call.1} parent=1 // loop_footer
      %s24 = sadd.s32 1, %s20
    $region7: #{tpu_custom_call.1} parent=1 // loop_footer_branch
      %19 = sbr.rel target = $region3
    $region8: #{tpu_custom_call.1} parent=1 // loop_exit
      _
    %1879 = vsyncpa [#allocation3], 1
    %s1880 = scalar_lea.sflag [#allocation3], 1
    %1881 = vsyncpa %s1880, 1
    %1882 = vsyncpa [#allocation5], 1

</llo_original>
